<compile_context>
chip_gen: v7x
topology: tpu7x:2x2x1
jax: 0.10.0
libtpu: 0.0.40
codegen_flags: <defaults>
</compile_context>

<pallas_src>
import functools
import numpy as np
import jax
import jax.numpy as jnp
from jax.experimental import pallas as pl
from jax.experimental.pallas import tpu as pltpu

LANE = 128


def _pad_to(n, m):
    return ((n + m - 1) // m) * m


# ----------------------------------------------------------------------------
# Offline operator construction (float64 numpy, deterministic, no checkpoint)
# ----------------------------------------------------------------------------
def build_operators(Nx=16, Ny=16, Lx=2 * np.pi, Ly=2 * np.pi,
                    mu=0.01, nu=1e-6, nv=2, B=1.0, wave_num=4,
                    topography=False):
    dk = Nx // 2 + 1
    Nxa, Nya = int(3 * Nx // 2), int(3 * Ny // 2)          # 3/2 dealias grid
    dka = Nxa // 2 + 1

    x = np.arange(Nx) * Lx / Nx
    y = np.arange(Ny) * Ly / Ny
    kr = 2 * np.pi / Lx * np.arange(dk)                     # (dk,)
    ky = 2 * np.pi / Ly * np.fft.fftfreq(Ny, 1.0 / Ny)      # (Ny,)
    krsq = kr[None, :] ** 2 + ky[:, None] ** 2              # (Ny, dk)
    irsq = np.zeros_like(krsq)
    irsq[krsq > 0] = 1.0 / krsq[krsq > 0]
    kr2d = np.broadcast_to(kr[None, :], (Ny, dk)).copy()
    ky2d = np.broadcast_to(ky[:, None], (Ny, dk)).copy()

    # qg_Lin
    Lin = -mu - nu * krsq ** nv + 1j * B * kr2d * irsq
    Lin[0, 0] = 0.0

    # Fs forcing (same for every batch element): spectral, norm='forward'
    f_force = wave_num * (np.cos(wave_num * y)[:, None] + np.cos(wave_num * x)[None, :])
    Fsh = np.fft.rfft2(f_force, norm="forward")             # (Ny, dk)

    if topography:
        xa = np.arange(Nxa) * Lx / Nxa
        ya = np.arange(Nya) * Ly / Nya
        eta = np.sin(3 * ya)[:, None] + np.cos(3 * xa)[None, :]
    else:
        eta = np.zeros((Nya, Nxa))

    # ---- DFT matrices (exact FFT equivalents for these small sizes) ----
    my = np.arange(Ny)
    kk = np.arange(dk)
    xx = np.arange(Nx)
    ya_idx = np.arange(Nya)
    xa_idx = np.arange(Nxa)

    # forward rfft2 on the base grid, scale 1/(Nx*Ny) folded into Fy
    Fy = np.exp(-2j * np.pi * np.outer(my, my) / Ny) / (Nx * Ny)     # (Ny, Ny)
    Fx = np.exp(-2j * np.pi * np.outer(xx, kk) / Nx)                 # (Nx, dk)

    # increase (zero pad to dealias grid) folded into the inverse transform
    mmap = np.where(my < Ny // 2, my, Nya - Ny + my)                 # row placement
    Ainc = np.exp(+2j * np.pi * np.outer(ya_idx, mmap) / Nya)        # (Nya, Ny)
    w_inc = np.where((kk == 0) | (kk == Nxa // 2), 1.0, 2.0)
    Binc = w_inc[:, None] * np.exp(+2j * np.pi * np.outer(kk, xa_idx) / Nxa)  # (dk, Nxa)

    # forward rfft2 on dealias grid + reduce, scale 1/(Nxa*Nya)
    Ared = np.exp(-2j * np.pi * np.outer(mmap, ya_idx) / Nya) / (Nxa * Nya)   # (Ny, Nya)
    Bred = np.exp(-2j * np.pi * np.outer(xa_idx, kk) / Nxa)                   # (Nxa, dk)

    # inverse rfft2 on the base grid (norm='forward' => unscaled inverse)
    Ginv = np.exp(+2j * np.pi * np.outer(my, my) / Ny)               # (Ny, Ny)
    w_g = np.where((kk == 0) | (kk == Nx // 2), 1.0, 2.0)
    Hinv = w_g[:, None] * np.exp(+2j * np.pi * np.outer(kk, xx) / Nx)  # (dk, Nx)

    # ---- Kronecker composition: row-major vec(A X B) = kron(A, B^T) vec(X) ----
    KF = np.kron(Fy, Fx.T)        # (Ny*dk , Ny*Nx ): q      -> qh
    KP = np.kron(Ainc, Binc.T)    # (Nya*Nxa, Ny*dk): qh     -> dealias physical (complex)
    KR = np.kron(Ared, Bred.T)    # (Ny*dk , Nya*Nxa): phys  -> reduced spectral
    KI = np.kron(Ginv, Hinv.T)    # (Ny*Nx , Ny*dk ): spectral -> base physical (complex)

    d_u = (1j * ky2d * irsq).ravel()          # uh = -i*ky*(-irsq*qh)
    d_v = (-1j * kr2d * irsq).ravel()         # vh =  i*kr*(-irsq*qh)

    # real linear maps (input q is real, outputs are real => take Re of operator)
    M_qa = np.real(KP @ KF)                                    # (576, 256)
    M_ua = np.real(KP @ (d_u[:, None] * KF))                   # (576, 256)
    M_va = np.real(KP @ (d_v[:, None] * KF))                   # (576, 256)
    C_uq = np.real(KI @ ((-1j * kr2d).ravel()[:, None] * KR))  # (256, 576)
    C_vq = np.real(KI @ ((-1j * ky2d).ravel()[:, None] * KR))  # (256, 576)
    C_q = np.real(KI @ (Lin.ravel()[:, None] * KF))            # (256, 256)
    F_out = np.real(KI @ Fsh.ravel())                          # (256,) constant forcing

    n_base = Ny * Nx
    n_alias = Nya * Nxa
    pa = _pad_to(n_alias, LANE)               # 576 -> 640 (lane-aligned blocks)

    def pad_cols(m, width):
        out = np.zeros((m.shape[0], width), dtype=np.float64)
        out[:, :m.shape[1]] = m
        return out

    def pad_rows(m, height):
        out = np.zeros((height, m.shape[1]), dtype=np.float64)
        out[:m.shape[0], :] = m
        return out

    # q_flat (., 256) @ A_op -> [q_a | u_a | v_a], each padded to `pa` lanes
    A_op = np.concatenate([pad_cols(M_qa.T, pa),
                           pad_cols(M_ua.T, pa),
                           pad_cols(M_va.T, pa)], axis=1)      # (256, 3*pa)

    # second stage split into three accumulating matmuls (no concat in-kernel)
    C_uq_k = pad_rows(C_uq.T, pa)                              # (pa, 256)
    C_vq_k = pad_rows(C_vq.T, pa)                              # (pa, 256)

    # Topography folding: uq = u_a*(q_a0 + eta); the u_a*eta / v_a*eta parts
    # are linear in q, so fold them into C_q offline (exact, zero runtime cost).
    eta_flat = eta.ravel()                                     # (576,)
    C_q_k = (C_q.T
             + (M_ua.T * eta_flat[None, :]) @ C_uq.T
             + (M_va.T * eta_flat[None, :]) @ C_vq.T)          # (256, 256)

    # Operators are cast + placed on device ONCE (no per-call host->device).
    ops = dict(
        A_op=jax.device_put(A_op.astype(np.float32)),
        C_uq=jax.device_put(C_uq_k.astype(np.float32)),
        C_vq=jax.device_put(C_vq_k.astype(np.float32)),
        C_q=jax.device_put(C_q_k.astype(np.float32)),
        F_phys=jax.device_put(F_out.reshape(1, n_base).astype(np.float32)),
    )
    ref = dict(Nx=Nx, Ny=Ny, dk=dk, Nxa=Nxa, Nya=Nya, dka=dka,
               irsq=irsq, kr2d=kr2d, ky2d=ky2d, Lin=Lin, Fsh=Fsh, eta=eta)
    return ops, ref


# ----------------------------------------------------------------------------
# Kernels
# ----------------------------------------------------------------------------
def qg_rhs_kernel(q_ref, a_ref, cuq_ref, cvq_ref, cq_ref, f_ref, out_ref):
    # q_ref   : (Bp, Nb)        flattened physical vorticity, Nb = Ny*Nx
    # a_ref   : (Nb, 3*Pa)      q -> [q_a | u_a | v_a] on 3/2 grid (Pa lane-padded)
    # cuq_ref : (Pa, Nb)        uq -> physical RHS contribution
    # cvq_ref : (Pa, Nb)        vq -> physical RHS contribution
    # cq_ref  : (Nb, Nb)        linear (+ folded topography) term
    # f_ref   : (1, Nb)         irfft2(Fs) physical-space forcing constant
    q = q_ref[...]
    pa = cuq_ref.shape[0]
    fields = jnp.dot(q, a_ref[...], preferred_element_type=jnp.float32)  # (Bp, 3*Pa)
    q_a = fields[:, :pa]
    u_a = fields[:, pa:2 * pa]
    v_a = fields[:, 2 * pa:]
    out = jnp.dot(u_a * q_a, cuq_ref[...], preferred_element_type=jnp.float32)
    out = out + jnp.dot(v_a * q_a, cvq_ref[...], preferred_element_type=jnp.float32)
    out = out + jnp.dot(q, cq_ref[...], preferred_element_type=jnp.float32)
    out_ref[...] = out + f_ref[...]


def qg_euler_kernel(dt, q_ref, a_ref, cuq_ref, cvq_ref, cq_ref, f_ref, out_ref):
    # grid=(T,); all BlockSpecs have constant index_maps, so the operators are
    # DMA'd into VMEM once and stay resident; q is carried in the resident
    # output block.
    t = pl.program_id(0)

    @pl.when(t == 0)
    def _():
        out_ref[...] = q_ref[...]

    q = out_ref[...]
    pa = cuq_ref.shape[0]
    fields = jnp.dot(q, a_ref[...], preferred_element_type=jnp.float32)
    q_a = fields[:, :pa]
    u_a = fields[:, pa:2 * pa]
    v_a = fields[:, 2 * pa:]
    rhs = jnp.dot(u_a * q_a, cuq_ref[...], preferred_element_type=jnp.float32)
    rhs = rhs + jnp.dot(v_a * q_a, cvq_ref[...], preferred_element_type=jnp.float32)
    rhs = rhs + jnp.dot(q, cq_ref[...], preferred_element_type=jnp.float32)
    rhs = rhs + f_ref[...]
    out_ref[...] = q + dt * rhs


def _cost(bp, n, pa, n_steps=1):
    flops = n_steps * (2 * bp * n * (3 * pa) + 2 * 2 * bp * pa * n
                       + 2 * bp * n * n + 4 * bp * pa)
    op_bytes = 4 * (n * 3 * pa + 2 * pa * n + n * n + n)      # operators (loaded once)
    io_bytes = 4 * (2 * bp * n)
    return pl.CostEstimate(flops=int(flops), transcendentals=0,
                           bytes_accessed=int(op_bytes + io_bytes))


# ----------------------------------------------------------------------------
# Wrappers (jitted; operators passed as device arrays, never re-uploaded)
# ----------------------------------------------------------------------------
@jax.jit
def qg_forward(q, ops):
    """Single RHS evaluation (== QG.forward of the PyTorch module)."""
    bs, Ny, Nx = q.shape
    n = Ny * Nx
    bp = _pad_to(max(bs, 8), 8)                    # sublane-aligned batch
    pa = ops["C_uq"].shape[0]

    q_flat = q.reshape(bs, n).astype(jnp.float32)
    if bp != bs:
        q_flat = jnp.pad(q_flat, ((0, bp - bs), (0, 0)))

    out_flat = pl.pallas_call(
        qg_rhs_kernel,
        out_shape=jax.ShapeDtypeStruct((bp, n), jnp.float32),
        compiler_params=pltpu.CompilerParams(vmem_limit_bytes=32 * 1024 * 1024),
        cost_estimate=_cost(bp, n, pa),
    )(q_flat, ops["A_op"], ops["C_uq"], ops["C_vq"], ops["C_q"], ops["F_phys"])

    return out_flat[:bs].reshape(bs, Ny, Nx)


@functools.partial(jax.jit, static_argnames=("n_steps", "dt"))
def qg_integrate(q, ops, n_steps, dt):
    """n_steps of forward Euler q <- q + dt*RHS(q) fused in ONE pallas_call;
    operators stay VMEM-resident across all steps."""
    bs, Ny, Nx = q.shape
    n = Ny * Nx
    bp = _pad_to(max(bs, 8), 8)
    pa = ops["C_uq"].shape[0]

    q_flat = q.reshape(bs, n).astype(jnp.float32)
    if bp != bs:
        q_flat = jnp.pad(q_flat, ((0, bp - bs), (0, 0)))

    const = lambda t: (0, 0)                       # same block every step => resident
    grid_spec = pltpu.PrefetchScalarGridSpec(
        num_scalar_prefetch=0,
        grid=(n_steps,),
        in_specs=[
            pl.BlockSpec((bp, n), const),          # q (read at step 0 only)
            pl.BlockSpec((n, 3 * pa), const),      # A_op
            pl.BlockSpec((pa, n), const),          # C_uq
            pl.BlockSpec((pa, n), const),          # C_vq
            pl.BlockSpec((n, n), const),           # C_q
            pl.BlockSpec((1, n), const),           # F_phys
        ],
        out_specs=pl.BlockSpec((bp, n), const),    # resident state carry
    )

    out_flat = pl.pallas_call(
        functools.partial(qg_euler_kernel, dt),
        out_shape=jax.ShapeDtypeStruct((bp, n), jnp.float32),
        grid_spec=grid_spec,
        compiler_params=pltpu.CompilerParams(
            dimension_semantics=("arbitrary",),
            vmem_limit_bytes=32 * 1024 * 1024),
        cost_estimate=_cost(bp, n, pa, n_steps),
    )(q_flat, ops["A_op"], ops["C_uq"], ops["C_vq"], ops["C_q"], ops["F_phys"])

    return out_flat[:bs].reshape(bs, Ny, Nx)


# ----------------------------------------------------------------------------
# Pure numpy float64 reference (mirrors the PyTorch module line by line)
# ----------------------------------------------------------------------------
def qg_reference(q, ref):
    Nx, Ny, dk = ref["Nx"], ref["Ny"], ref["dk"]
    Nxa, Nya, dka = ref["Nxa"], ref["Nya"], ref["dka"]
    irsq, kr2d, ky2d = ref["irsq"], ref["kr2d"], ref["ky2d"]
    Lin, Fsh, eta = ref["Lin"], ref["Fsh"], ref["eta"]

    def increase(x):
        z = np.zeros((x.shape[0], Nya, dka), dtype=np.complex128)
        z[:, : Ny // 2, :dk] = x[:, : Ny // 2, :dk]
        z[:, Nya - Ny // 2:, :dk] = x[:, Ny // 2: Ny, :dk]
        return z

    def reduce(x):
        z = np.zeros((x.shape[0], Ny, dk), dtype=np.complex128)
        z[:, : Ny // 2, :] = x[:, : Ny // 2, :dk]
        z[:, Ny // 2:, :] = x[:, x.shape[1] - Ny // 2:, :dk]
        return z

    qh = np.fft.rfft2(q, norm="forward")
    ph = -qh * irsq[None]
    uh = -1j * ky2d[None] * ph
    vh = 1j * kr2d[None] * ph
    q_a = np.fft.irfft2(increase(qh), s=(Nya, Nxa), norm="forward") + eta[None]
    u_a = np.fft.irfft2(increase(uh), s=(Nya, Nxa), norm="forward")
    v_a = np.fft.irfft2(increase(vh), s=(Nya, Nxa), norm="forward")
    uqh = reduce(np.fft.rfft2(u_a * q_a, norm="forward"))
    vqh = reduce(np.fft.rfft2(v_a * q_a, norm="forward"))
    S = -1j * kr2d[None] * uqh - 1j * ky2d[None] * vqh + Lin[None] * qh + Fsh[None]
    return np.fft.irfft2(S, s=(Ny, Nx), norm="forward")


# ----------------------------------------------------------------------------
if __name__ == "__main__":
    bs, Nx, Ny = 2, 16, 16
    ops, ref = build_operators(Nx=Nx, Ny=Ny, mu=0.01, nu=1e-6, nv=2, B=1.0,
                               wave_num=4, topography=False)

    key = jax.random.PRNGKey(0)
    q = jax.random.normal(key, (bs, Ny, Nx), dtype=jnp.float32)
    q64 = np.asarray(q, dtype=np.float64)

    # --- single RHS evaluation (the module's forward) ---
    out = jax.block_until_ready(qg_forward(q, ops))
    expected = qg_reference(q64, ref)
    err = np.max(np.abs(np.asarray(out, dtype=np.float64) - expected))
    scale = max(np.max(np.abs(expected)), 1e-30)
    assert np.isfinite(np.asarray(out)).all()
    assert err / scale < 1e-3, f"single-step relative error too large: {err / scale}"

    # --- fused multi-step (operator-resident) Euler integration ---
    n_steps, dt = 8, 1e-3
    out_T = jax.block_until_ready(qg_integrate(q, ops, n_steps, dt))
    exp_T = q64.copy()
    for _ in range(n_steps):
        exp_T = exp_T + dt * qg_reference(exp_T, ref)
    errT = np.max(np.abs(np.asarray(out_T, dtype=np.float64) - exp_T))
    scaleT = max(np.max(np.abs(exp_T)), 1e-30)
    assert np.isfinite(np.asarray(out_T)).all()
    assert errT / scaleT < 1e-3, f"multi-step relative error too large: {errT / scaleT}"

    print("KERNEL_OK")
</pallas_src>

<mosaic_0001>
module attributes {stable_mosaic.version = 11 : i64} {
  func.func @qg_rhs_kernel(%arg0: memref<8x256xf32, #tpu.memory_space<vmem>>, %arg1: memref<256x1920xf32, #tpu.memory_space<vmem>>, %arg2: memref<640x256xf32, #tpu.memory_space<vmem>>, %arg3: memref<640x256xf32, #tpu.memory_space<vmem>>, %arg4: memref<256x256xf32, #tpu.memory_space<vmem>>, %arg5: memref<1x256xf32, #tpu.memory_space<vmem>>, %arg6: memref<8x256xf32, #tpu.memory_space<vmem>>) attributes {dimension_semantics = [], scalar_prefetch = 0 : i64, scratch_operands = 0 : i64, tpu.core_type = #tpu.core_type<tc>} {
    %c0 = arith.constant 0 : index
    %c0_0 = arith.constant 0 : index
    %0 = vector.load %arg0[%c0, %c0_0] : memref<8x256xf32, #tpu.memory_space<vmem>>, vector<8x256xf32>
    %c0_1 = arith.constant 0 : index
    %c0_2 = arith.constant 0 : index
    %1 = vector.load %arg1[%c0_1, %c0_2] : memref<256x1920xf32, #tpu.memory_space<vmem>>, vector<256x1920xf32>
    %cst = arith.constant dense<0.000000e+00> : vector<8x1920xf32>
    %2 = tpu.matmul %0, %1, %cst {dimension_numbers = #tpu.dot_dimension_numbers<[1], [0], [0], [1], [0, 0, 1, 1], [], []>} : vector<8x256xf32>, vector<256x1920xf32>, vector<8x1920xf32> -> vector<8x1920xf32>
    %3 = vector.extract_strided_slice %2 {offsets = [0, 0], sizes = [8, 640], strides = [1, 1]} : vector<8x1920xf32> to vector<8x640xf32>
    %4 = vector.extract_strided_slice %2 {offsets = [0, 640], sizes = [8, 640], strides = [1, 1]} : vector<8x1920xf32> to vector<8x640xf32>
    %5 = vector.extract_strided_slice %2 {offsets = [0, 1280], sizes = [8, 640], strides = [1, 1]} : vector<8x1920xf32> to vector<8x640xf32>
    %6 = arith.mulf %4, %3 : vector<8x640xf32>
    %c0_3 = arith.constant 0 : index
    %c0_4 = arith.constant 0 : index
    %7 = vector.load %arg2[%c0_3, %c0_4] : memref<640x256xf32, #tpu.memory_space<vmem>>, vector<640x256xf32>
    %cst_5 = arith.constant dense<0.000000e+00> : vector<8x256xf32>
    %8 = tpu.matmul %6, %7, %cst_5 {dimension_numbers = #tpu.dot_dimension_numbers<[1], [0], [0], [1], [0, 0, 1, 1], [], []>} : vector<8x640xf32>, vector<640x256xf32>, vector<8x256xf32> -> vector<8x256xf32>
    %9 = arith.mulf %5, %3 : vector<8x640xf32>
    %c0_6 = arith.constant 0 : index
    %c0_7 = arith.constant 0 : index
    %10 = vector.load %arg3[%c0_6, %c0_7] : memref<640x256xf32, #tpu.memory_space<vmem>>, vector<640x256xf32>
    %cst_8 = arith.constant dense<0.000000e+00> : vector<8x256xf32>
    %11 = tpu.matmul %9, %10, %cst_8 {dimension_numbers = #tpu.dot_dimension_numbers<[1], [0], [0], [1], [0, 0, 1, 1], [], []>} : vector<8x640xf32>, vector<640x256xf32>, vector<8x256xf32> -> vector<8x256xf32>
    %12 = arith.addf %8, %11 : vector<8x256xf32>
    %c0_9 = arith.constant 0 : index
    %c0_10 = arith.constant 0 : index
    %13 = vector.load %arg4[%c0_9, %c0_10] : memref<256x256xf32, #tpu.memory_space<vmem>>, vector<256x256xf32>
    %cst_11 = arith.constant dense<0.000000e+00> : vector<8x256xf32>
    %14 = tpu.matmul %0, %13, %cst_11 {dimension_numbers = #tpu.dot_dimension_numbers<[1], [0], [0], [1], [0, 0, 1, 1], [], []>} : vector<8x256xf32>, vector<256x256xf32>, vector<8x256xf32> -> vector<8x256xf32>
    %15 = arith.addf %12, %14 : vector<8x256xf32>
    %c0_12 = arith.constant 0 : index
    %c0_13 = arith.constant 0 : index
    %16 = vector.load %arg5[%c0_12, %c0_13] : memref<1x256xf32, #tpu.memory_space<vmem>>, vector<1x256xf32>
    %17 = vector.broadcast %16 : vector<1x256xf32> to vector<8x256xf32>
    %18 = arith.addf %15, %17 : vector<8x256xf32>
    %c0_14 = arith.constant 0 : index
    %c0_15 = arith.constant 0 : index
    %19 = vector.load %arg6[%c0_14, %c0_15] : memref<8x256xf32, #tpu.memory_space<vmem>>, vector<8x256xf32>
    tpu.vector_store %arg6[%c0_14, %c0_15], %18 {strides = array<i32>} : memref<8x256xf32, #tpu.memory_space<vmem>>, vector<8x256xf32>,
    return
  }
}

</mosaic_0001>

<llo_original>
// kernel: qg_forward.1
$region0: #{qg_forward.1}
  #allocation0 [shape = 'u32[]', space=smem, size = 0x4, offset = 0x4, fixed_abs, tag = 'smem constant byte address 0x4 - core index']
  #allocation1 [shape = 'u32[144,128]{1,0:T(1,128)}', space=vmem, size = 0x12000, scoped, tag = 'internal scratch']
  %s0 = inlined_call_operand.vmem [shape: f32[8,256], index: 0, kind: input, shape index: {}]
  %s1 = inlined_call_operand.hbm [shape: f32[256,1920], index: 1, kind: input, shape index: {}]
  %s2 = inlined_call_operand.hbm [shape: f32[640,256], index: 2, kind: input, shape index: {}]
  %s3 = inlined_call_operand.hbm [shape: f32[640,256], index: 3, kind: input, shape index: {}]
  %s4 = inlined_call_operand.hbm [shape: f32[256,256], index: 4, kind: input, shape index: {}]
  %s5 = inlined_call_operand.hbm [shape: f32[1,256], index: 5, kind: input, shape index: {}]
  %s6 = inlined_call_operand.vmem [shape: f32[8,256], index: 6, kind: output, shape index: {}]
  %s7 = sld [smem:[#allocation0]]
  $region54: #{qg_forward.1} parent=0
    _
  %s9 = ssub.s32 1, %s7
  %s10 = scalar_select 0, %s9, %s7
  $region1: #{qg_forward.1} parent=0
    #allocation2 [shape = 'u8[1966080]{0}', space=vmem, size = 0x1e0000, scoped, tag = 'input window, operand 1, single buffered']
    #allocation3 [shape = 's32[1]{0}', space=sflag, size = 0x4, scoped, tag = 'scoped memory for qg_forward.1']
    #allocation4 [shape = 'u8[655360]{0}', space=vmem, size = 0xa0000, scoped, tag = 'input window, operand 2, single buffered']
    #allocation5 [shape = 's32[1]{0}', space=sflag, size = 0x4, scoped, tag = 'scoped memory for qg_forward.1']
    #allocation6 [shape = 'u8[655360]{0}', space=vmem, size = 0xa0000, scoped, tag = 'input window, operand 3, single buffered']
    #allocation7 [shape = 'u8[262144]{0}', space=vmem, size = 0x40000, scoped, tag = 'input window, operand 4, single buffered']
    #allocation8 [shape = 's32[1]{0}', space=sflag, size = 0x4, scoped, tag = 'scoped memory for qg_forward.1']
    #allocation9 [shape = 'u8[1024]{0}', space=vmem, size = 0x400, scoped, tag = 'input window, operand 5, single buffered']
    %11 = vsyncpa [#allocation3], 0
    %12 = vsyncpa [#allocation5], 0
    %13 = vsyncpa [#allocation8], 0
    // Predicated region
    $region2: #{qg_forward.1} parent=1 // pred_check
      _
    $region3: #{qg_forward.1} parent=1 // pred_check_branch
      %15 = sbr.rel (0) target = $region5
    $region4: #{qg_forward.1} parent=1 // pred_region
      _
    $region5: #{qg_forward.1} parent=1 // pred_fallthru
      _
    // Predicated region
    $region6: #{qg_forward.1} parent=1 // pred_check
      _
    $region7: #{qg_forward.1} parent=1 // pred_check_branch
      %17 = sbr.rel (0) target = $region9
    $region8: #{qg_forward.1} parent=1 // pred_region
      %s19 = ssub.s32 61440, 61440
      %20 = vsyncadd [#allocation3], %s19
      %s21 = sshll.u32 [#allocation2], 4
      %s22 = int_to_ptr.vmem [resolvable:$true] %s21
      %27 = dma.hbm_to_vmem [thread:$0]  %s1, 61440, %s22, [#allocation3], 1920, 1920, 120
    $region9: #{qg_forward.1} parent=1 // pred_fallthru
      _
    // Predicated region
    $region10: #{qg_forward.1} parent=1 // pred_check
      _
    $region11: #{qg_forward.1} parent=1 // pred_check_branch
      %29 = sbr.rel (0) target = $region13
    $region12: #{qg_forward.1} parent=1 // pred_region
      %s31 = ssub.s32 20480, 20480
      %32 = vsyncadd [#allocation5], %s31
      %s33 = sshll.u32 [#allocation4], 4
      %s34 = int_to_ptr.vmem [resolvable:$true] %s33
      %39 = dma.hbm_to_vmem [thread:$0]  %s2, 20480, %s34, [#allocation5], 256, 256, 16
    $region13: #{qg_forward.1} parent=1 // pred_fallthru
      _
    // Predicated region
    $region14: #{qg_forward.1} parent=1 // pred_check
      _
    $region15: #{qg_forward.1} parent=1 // pred_check_branch
      %41 = sbr.rel (0) target = $region17
    $region16: #{qg_forward.1} parent=1 // pred_region
      %s43 = ssub.s32 20480, 20480
      %44 = vsyncadd [#allocation5], %s43
      %s45 = sshll.u32 [#allocation6], 4
      %s46 = int_to_ptr.vmem [resolvable:$true] %s45
      %51 = dma.hbm_to_vmem [thread:$0]  %s3, 20480, %s46, [#allocation5], 256, 256, 16
    $region17: #{qg_forward.1} parent=1 // pred_fallthru
      _
    // Predicated region
    $region18: #{qg_forward.1} parent=1 // pred_check
      _
    $region19: #{qg_forward.1} parent=1 // pred_check_branch
      %53 = sbr.rel (0) target = $region21
    $region20: #{qg_forward.1} parent=1 // pred_region
      %s55 = ssub.s32 8192, 8192
      %56 = vsyncadd [#allocation8], %s55
      %s57 = sshll.u32 [#allocation7], 4
      %s58 = int_to_ptr.vmem [resolvable:$true] %s57
      %63 = dma.hbm_to_vmem [thread:$0]  %s4, 8192, %s58, [#allocation8], 256, 256, 16
    $region21: #{qg_forward.1} parent=1 // pred_fallthru
      _
    // Predicated region
    $region22: #{qg_forward.1} parent=1 // pred_check
      _
    $region23: #{qg_forward.1} parent=1 // pred_check_branch
      %65 = sbr.rel (0) target = $region25
    $region24: #{qg_forward.1} parent=1 // pred_region
      %s67 = ssub.s32 32, 32
      %68 = vsyncadd [#allocation8], %s67
      %s70 = sshll.u32 [#allocation9], 4
      %s71 = int_to_ptr.vmem [resolvable:$true] %s70
      %73 = dma.hbm_to_vmem [thread:$0]  %s5, 32, %s71, [#allocation8]
    $region25: #{qg_forward.1} parent=1 // pred_fallthru
      _
    // Predicated region
    $region26: #{qg_forward.1} parent=1 // pred_check
      _
    $region27: #{qg_forward.1} parent=1 // pred_check_branch
      %75 = sbr.rel (0) target = $region29
    $region28: #{qg_forward.1} parent=1 // pred_region
      %76 = dma.done [#allocation3], 61440
    $region29: #{qg_forward.1} parent=1 // pred_fallthru
      _
    // Predicated region
    $region30: #{qg_forward.1} parent=1 // pred_check
      _
    $region31: #{qg_forward.1} parent=1 // pred_check_branch
      %78 = sbr.rel (0) target = $region33
    $region32: #{qg_forward.1} parent=1 // pred_region
      %79 = dma.done [#allocation5], 20480
    $region33: #{qg_forward.1} parent=1 // pred_fallthru
      _
    // Predicated region
    $region34: #{qg_forward.1} parent=1 // pred_check
      _
    $region35: #{qg_forward.1} parent=1 // pred_check_branch
      %81 = sbr.rel (0) target = $region37
    $region36: #{qg_forward.1} parent=1 // pred_region
      %82 = dma.done [#allocation5], 20480
    $region37: #{qg_forward.1} parent=1 // pred_fallthru
      _
    // Predicated region
    $region38: #{qg_forward.1} parent=1 // pred_check
      _
    $region39: #{qg_forward.1} parent=1 // pred_check_branch
      %84 = sbr.rel (0) target = $region41
    $region40: #{qg_forward.1} parent=1 // pred_region
      %85 = dma.done [#allocation8], 8192
    $region41: #{qg_forward.1} parent=1 // pred_fallthru
      _
    // Predicated region
    $region42: #{qg_forward.1} parent=1 // pred_check
      _
    $region43: #{qg_forward.1} parent=1 // pred_check_branch
      %87 = sbr.rel (0) target = $region45
    $region44: #{qg_forward.1} parent=1 // pred_region
      %88 = dma.done [#allocation8], 32
    $region45: #{qg_forward.1} parent=1 // pred_fallthru
      _
    %v89 = vld [vmem:[%s0] sm:$0xff]
    %v90 = vld [vmem:[%s0 + $0x8] sm:$0xff]
    %v91 = vld [vmem:[#allocation2] sm:$0xff]
    %v92 = vld [vmem:[#allocation2 + $0x8] sm:$0xff]
    %v93 = vld [vmem:[#allocation2 + $0x10] sm:$0xff]
    %v94 = vld [vmem:[#allocation2 + $0x18] sm:$0xff]
    %v95 = vld [vmem:[#allocation2 + $0x20] sm:$0xff]
    %v96 = vld [vmem:[#allocation2 + $0x28] sm:$0xff]
    %v97 = vld [vmem:[#allocation2 + $0x30] sm:$0xff]
    %v98 = vld [vmem:[#allocation2 + $0x38] sm:$0xff]
    %v99 = vld [vmem:[#allocation2 + $0x40] sm:$0xff]
    %v100 = vld [vmem:[#allocation2 + $0x48] sm:$0xff]
    %v101 = vld [vmem:[#allocation2 + $0x50] sm:$0xff]
    %v102 = vld [vmem:[#allocation2 + $0x58] sm:$0xff]
    %v103 = vld [vmem:[#allocation2 + $0x60] sm:$0xff]
    %v104 = vld [vmem:[#allocation2 + $0x68] sm:$0xff]
    %v105 = vld [vmem:[#allocation2 + $0x70] sm:$0xff]
    %v106 = vld [vmem:[#allocation2 + $0x78] sm:$0xff]
    %v107 = vld [vmem:[#allocation2 + $0x80] sm:$0xff]
    %v108 = vld [vmem:[#allocation2 + $0x88] sm:$0xff]
    %v109 = vld [vmem:[#allocation2 + $0x90] sm:$0xff]
    %v110 = vld [vmem:[#allocation2 + $0x98] sm:$0xff]
    %v111 = vld [vmem:[#allocation2 + $0xa0] sm:$0xff]
    %v112 = vld [vmem:[#allocation2 + $0xa8] sm:$0xff]
    %v113 = vld [vmem:[#allocation2 + $0xb0] sm:$0xff]
    %v114 = vld [vmem:[#allocation2 + $0xb8] sm:$0xff]
    %v115 = vld [vmem:[#allocation2 + $0xc0] sm:$0xff]
    %v116 = vld [vmem:[#allocation2 + $0xc8] sm:$0xff]
    %v117 = vld [vmem:[#allocation2 + $0xd0] sm:$0xff]
    %v118 = vld [vmem:[#allocation2 + $0xd8] sm:$0xff]
    %v119 = vld [vmem:[#allocation2 + $0xe0] sm:$0xff]
    %v120 = vld [vmem:[#allocation2 + $0xe8] sm:$0xff]
    %v121 = vld [vmem:[#allocation2 + $0xf0] sm:$0xff]
    %v122 = vld [vmem:[#allocation2 + $0xf8] sm:$0xff]
    %v123 = vld [vmem:[#allocation2 + $0x100] sm:$0xff]
    %v124 = vld [vmem:[#allocation2 + $0x108] sm:$0xff]
    %v125 = vld [vmem:[#allocation2 + $0x110] sm:$0xff]
    %v126 = vld [vmem:[#allocation2 + $0x118] sm:$0xff]
    %v127 = vld [vmem:[#allocation2 + $0x120] sm:$0xff]
    %v128 = vld [vmem:[#allocation2 + $0x128] sm:$0xff]
    %v129 = vld [vmem:[#allocation2 + $0x130] sm:$0xff]
    %v130 = vld [vmem:[#allocation2 + $0x138] sm:$0xff]
    %v131 = vld [vmem:[#allocation2 + $0x140] sm:$0xff]
    %v132 = vld [vmem:[#allocation2 + $0x148] sm:$0xff]
    %v133 = vld [vmem:[#allocation2 + $0x150] sm:$0xff]
    %v134 = vld [vmem:[#allocation2 + $0x158] sm:$0xff]
    %v135 = vld [vmem:[#allocation2 + $0x160] sm:$0xff]
    %v136 = vld [vmem:[#allocation2 + $0x168] sm:$0xff]
    %v137 = vld [vmem:[#allocation2 + $0x170] sm:$0xff]
    %v138 = vld [vmem:[#allocation2 + $0x178] sm:$0xff]
    %v139 = vld [vmem:[#allocation2 + $0x180] sm:$0xff]
    %v140 = vld [vmem:[#allocation2 + $0x188] sm:$0xff]
    %v141 = vld [vmem:[#allocation2 + $0x190] sm:$0xff]
    %v142 = vld [vmem:[#allocation2 + $0x198] sm:$0xff]
    %v143 = vld [vmem:[#allocation2 + $0x1a0] sm:$0xff]
    %v144 = vld [vmem:[#allocation2 + $0x1a8] sm:$0xff]
    %v145 = vld [vmem:[#allocation2 + $0x1b0] sm:$0xff]
    %v146 = vld [vmem:[#allocation2 + $0x1b8] sm:$0xff]
    %v147 = vld [vmem:[#allocation2 + $0x1c0] sm:$0xff]
    %v148 = vld [vmem:[#allocation2 + $0x1c8] sm:$0xff]
    %v149 = vld [vmem:[#allocation2 + $0x1d0] sm:$0xff]
    %v150 = vld [vmem:[#allocation2 + $0x1d8] sm:$0xff]
    %v151 = vld [vmem:[#allocation2 + $0x1e0] sm:$0xff]
    %v152 = vld [vmem:[#allocation2 + $0x1e8] sm:$0xff]
    %v153 = vld [vmem:[#allocation2 + $0x1f0] sm:$0xff]
    %v154 = vld [vmem:[#allocation2 + $0x1f8] sm:$0xff]
    %v155 = vld [vmem:[#allocation2 + $0x200] sm:$0xff]
    %v156 = vld [vmem:[#allocation2 + $0x208] sm:$0xff]
    %v157 = vld [vmem:[#allocation2 + $0x210] sm:$0xff]
    %v158 = vld [vmem:[#allocation2 + $0x218] sm:$0xff]
    %v159 = vld [vmem:[#allocation2 + $0x220] sm:$0xff]
    %v160 = vld [vmem:[#allocation2 + $0x228] sm:$0xff]
    %v161 = vld [vmem:[#allocation2 + $0x230] sm:$0xff]
    %v162 = vld [vmem:[#allocation2 + $0x238] sm:$0xff]
    %v163 = vld [vmem:[#allocation2 + $0x240] sm:$0xff]
    %v164 = vld [vmem:[#allocation2 + $0x248] sm:$0xff]
    %v165 = vld [vmem:[#allocation2 + $0x250] sm:$0xff]
    %v166 = vld [vmem:[#allocation2 + $0x258] sm:$0xff]
    %v167 = vld [vmem:[#allocation2 + $0x260] sm:$0xff]
    %v168 = vld [vmem:[#allocation2 + $0x268] sm:$0xff]
    %v169 = vld [vmem:[#allocation2 + $0x270] sm:$0xff]
    %v170 = vld [vmem:[#allocation2 + $0x278] sm:$0xff]
    %v171 = vld [vmem:[#allocation2 + $0x280] sm:$0xff]
    %v172 = vld [vmem:[#allocation2 + $0x288] sm:$0xff]
    %v173 = vld [vmem:[#allocation2 + $0x290] sm:$0xff]
    %v174 = vld [vmem:[#allocation2 + $0x298] sm:$0xff]
    %v175 = vld [vmem:[#allocation2 + $0x2a0] sm:$0xff]
    %v176 = vld [vmem:[#allocation2 + $0x2a8] sm:$0xff]
    %v177 = vld [vmem:[#allocation2 + $0x2b0] sm:$0xff]
    %v178 = vld [vmem:[#allocation2 + $0x2b8] sm:$0xff]
    %v179 = vld [vmem:[#allocation2 + $0x2c0] sm:$0xff]
    %v180 = vld [vmem:[#allocation2 + $0x2c8] sm:$0xff]
    %v181 = vld [vmem:[#allocation2 + $0x2d0] sm:$0xff]
    %v182 = vld [vmem:[#allocation2 + $0x2d8] sm:$0xff]
    %v183 = vld [vmem:[#allocation2 + $0x2e0] sm:$0xff]
    %v184 = vld [vmem:[#allocation2 + $0x2e8] sm:$0xff]
    %v185 = vld [vmem:[#allocation2 + $0x2f0] sm:$0xff]
    %v186 = vld [vmem:[#allocation2 + $0x2f8] sm:$0xff]
    %v187 = vld [vmem:[#allocation2 + $0x300] sm:$0xff]
    %v188 = vld [vmem:[#allocation2 + $0x308] sm:$0xff]
    %v189 = vld [vmem:[#allocation2 + $0x310] sm:$0xff]
    %v190 = vld [vmem:[#allocation2 + $0x318] sm:$0xff]
    %v191 = vld [vmem:[#allocation2 + $0x320] sm:$0xff]
    %v192 = vld [vmem:[#allocation2 + $0x328] sm:$0xff]
    %v193 = vld [vmem:[#allocation2 + $0x330] sm:$0xff]
    %v194 = vld [vmem:[#allocation2 + $0x338] sm:$0xff]
    %v195 = vld [vmem:[#allocation2 + $0x340] sm:$0xff]
    %v196 = vld [vmem:[#allocation2 + $0x348] sm:$0xff]
    %v197 = vld [vmem:[#allocation2 + $0x350] sm:$0xff]
    %v198 = vld [vmem:[#allocation2 + $0x358] sm:$0xff]
    %v199 = vld [vmem:[#allocation2 + $0x360] sm:$0xff]
    %v200 = vld [vmem:[#allocation2 + $0x368] sm:$0xff]
    %v201 = vld [vmem:[#allocation2 + $0x370] sm:$0xff]
    %v202 = vld [vmem:[#allocation2 + $0x378] sm:$0xff]
    %v203 = vld [vmem:[#allocation2 + $0x380] sm:$0xff]
    %v204 = vld [vmem:[#allocation2 + $0x388] sm:$0xff]
    %v205 = vld [vmem:[#allocation2 + $0x390] sm:$0xff]
    %v206 = vld [vmem:[#allocation2 + $0x398] sm:$0xff]
    %v207 = vld [vmem:[#allocation2 + $0x3a0] sm:$0xff]
    %v208 = vld [vmem:[#allocation2 + $0x3a8] sm:$0xff]
    %v209 = vld [vmem:[#allocation2 + $0x3b0] sm:$0xff]
    %v210 = vld [vmem:[#allocation2 + $0x3b8] sm:$0xff]
    %v211 = vld [vmem:[#allocation2 + $0x3c0] sm:$0xff]
    %v212 = vld [vmem:[#allocation2 + $0x3c8] sm:$0xff]
    %v213 = vld [vmem:[#allocation2 + $0x3d0] sm:$0xff]
    %v214 = vld [vmem:[#allocation2 + $0x3d8] sm:$0xff]
    %v215 = vld [vmem:[#allocation2 + $0x3e0] sm:$0xff]
    %v216 = vld [vmem:[#allocation2 + $0x3e8] sm:$0xff]
    %v217 = vld [vmem:[#allocation2 + $0x3f0] sm:$0xff]
    %v218 = vld [vmem:[#allocation2 + $0x3f8] sm:$0xff]
    %v219 = vld [vmem:[#allocation2 + $0x400] sm:$0xff]
    %v220 = vld [vmem:[#allocation2 + $0x408] sm:$0xff]
    %v221 = vld [vmem:[#allocation2 + $0x410] sm:$0xff]
    %v222 = vld [vmem:[#allocation2 + $0x418] sm:$0xff]
    %v223 = vld [vmem:[#allocation2 + $0x420] sm:$0xff]
    %v224 = vld [vmem:[#allocation2 + $0x428] sm:$0xff]
    %v225 = vld [vmem:[#allocation2 + $0x430] sm:$0xff]
    %v226 = vld [vmem:[#allocation2 + $0x438] sm:$0xff]
    %v227 = vld [vmem:[#allocation2 + $0x440] sm:$0xff]
    %v228 = vld [vmem:[#allocation2 + $0x448] sm:$0xff]
    %v229 = vld [vmem:[#allocation2 + $0x450] sm:$0xff]
    %v230 = vld [vmem:[#allocation2 + $0x458] sm:$0xff]
    %v231 = vld [vmem:[#allocation2 + $0x460] sm:$0xff]
    %v232 = vld [vmem:[#allocation2 + $0x468] sm:$0xff]
    %v233 = vld [vmem:[#allocation2 + $0x470] sm:$0xff]
    %v234 = vld [vmem:[#allocation2 + $0x478] sm:$0xff]
    %v235 = vld [vmem:[#allocation2 + $0x480] sm:$0xff]
    %v236 = vld [vmem:[#allocation2 + $0x488] sm:$0xff]
    %v237 = vld [vmem:[#allocation2 + $0x490] sm:$0xff]
    %v238 = vld [vmem:[#allocation2 + $0x498] sm:$0xff]
    %v239 = vld [vmem:[#allocation2 + $0x4a0] sm:$0xff]
    %v240 = vld [vmem:[#allocation2 + $0x4a8] sm:$0xff]
    %v241 = vld [vmem:[#allocation2 + $0x4b0] sm:$0xff]
    %v242 = vld [vmem:[#allocation2 + $0x4b8] sm:$0xff]
    %v243 = vld [vmem:[#allocation2 + $0x4c0] sm:$0xff]
    %v244 = vld [vmem:[#allocation2 + $0x4c8] sm:$0xff]
    %v245 = vld [vmem:[#allocation2 + $0x4d0] sm:$0xff]
    %v246 = vld [vmem:[#allocation2 + $0x4d8] sm:$0xff]
    %v247 = vld [vmem:[#allocation2 + $0x4e0] sm:$0xff]
    %v248 = vld [vmem:[#allocation2 + $0x4e8] sm:$0xff]
    %v249 = vld [vmem:[#allocation2 + $0x4f0] sm:$0xff]
    %v250 = vld [vmem:[#allocation2 + $0x4f8] sm:$0xff]
    %v251 = vld [vmem:[#allocation2 + $0x500] sm:$0xff]
    %v252 = vld [vmem:[#allocation2 + $0x508] sm:$0xff]
    %v253 = vld [vmem:[#allocation2 + $0x510] sm:$0xff]
    %v254 = vld [vmem:[#allocation2 + $0x518] sm:$0xff]
    %v255 = vld [vmem:[#allocation2 + $0x520] sm:$0xff]
    %v256 = vld [vmem:[#allocation2 + $0x528] sm:$0xff]
    %v257 = vld [vmem:[#allocation2 + $0x530] sm:$0xff]
    %v258 = vld [vmem:[#allocation2 + $0x538] sm:$0xff]
    %v259 = vld [vmem:[#allocation2 + $0x540] sm:$0xff]
    %v260 = vld [vmem:[#allocation2 + $0x548] sm:$0xff]
    %v261 = vld [vmem:[#allocation2 + $0x550] sm:$0xff]
    %v262 = vld [vmem:[#allocation2 + $0x558] sm:$0xff]
    %v263 = vld [vmem:[#allocation2 + $0x560] sm:$0xff]
    %v264 = vld [vmem:[#allocation2 + $0x568] sm:$0xff]
    %v265 = vld [vmem:[#allocation2 + $0x570] sm:$0xff]
    %v266 = vld [vmem:[#allocation2 + $0x578] sm:$0xff]
    %v267 = vld [vmem:[#allocation2 + $0x580] sm:$0xff]
    %v268 = vld [vmem:[#allocation2 + $0x588] sm:$0xff]
    %v269 = vld [vmem:[#allocation2 + $0x590] sm:$0xff]
    %v270 = vld [vmem:[#allocation2 + $0x598] sm:$0xff]
    %v271 = vld [vmem:[#allocation2 + $0x5a0] sm:$0xff]
    %v272 = vld [vmem:[#allocation2 + $0x5a8] sm:$0xff]
    %v273 = vld [vmem:[#allocation2 + $0x5b0] sm:$0xff]
    %v274 = vld [vmem:[#allocation2 + $0x5b8] sm:$0xff]
    %v275 = vld [vmem:[#allocation2 + $0x5c0] sm:$0xff]
    %v276 = vld [vmem:[#allocation2 + $0x5c8] sm:$0xff]
    %v277 = vld [vmem:[#allocation2 + $0x5d0] sm:$0xff]
    %v278 = vld [vmem:[#allocation2 + $0x5d8] sm:$0xff]
    %v279 = vld [vmem:[#allocation2 + $0x5e0] sm:$0xff]
    %v280 = vld [vmem:[#allocation2 + $0x5e8] sm:$0xff]
    %v281 = vld [vmem:[#allocation2 + $0x5f0] sm:$0xff]
    %v282 = vld [vmem:[#allocation2 + $0x5f8] sm:$0xff]
    %v283 = vld [vmem:[#allocation2 + $0x600] sm:$0xff]
    %v284 = vld [vmem:[#allocation2 + $0x608] sm:$0xff]
    %v285 = vld [vmem:[#allocation2 + $0x610] sm:$0xff]
    %v286 = vld [vmem:[#allocation2 + $0x618] sm:$0xff]
    %v287 = vld [vmem:[#allocation2 + $0x620] sm:$0xff]
    %v288 = vld [vmem:[#allocation2 + $0x628] sm:$0xff]
    %v289 = vld [vmem:[#allocation2 + $0x630] sm:$0xff]
    %v290 = vld [vmem:[#allocation2 + $0x638] sm:$0xff]
    %v291 = vld [vmem:[#allocation2 + $0x640] sm:$0xff]
    %v292 = vld [vmem:[#allocation2 + $0x648] sm:$0xff]
    %v293 = vld [vmem:[#allocation2 + $0x650] sm:$0xff]
    %v294 = vld [vmem:[#allocation2 + $0x658] sm:$0xff]
    %v295 = vld [vmem:[#allocation2 + $0x660] sm:$0xff]
    %v296 = vld [vmem:[#allocation2 + $0x668] sm:$0xff]
    %v297 = vld [vmem:[#allocation2 + $0x670] sm:$0xff]
    %v298 = vld [vmem:[#allocation2 + $0x678] sm:$0xff]
    %v299 = vld [vmem:[#allocation2 + $0x680] sm:$0xff]
    %v300 = vld [vmem:[#allocation2 + $0x688] sm:$0xff]
    %v301 = vld [vmem:[#allocation2 + $0x690] sm:$0xff]
    %v302 = vld [vmem:[#allocation2 + $0x698] sm:$0xff]
    %v303 = vld [vmem:[#allocation2 + $0x6a0] sm:$0xff]
    %v304 = vld [vmem:[#allocation2 + $0x6a8] sm:$0xff]
    %v305 = vld [vmem:[#allocation2 + $0x6b0] sm:$0xff]
    %v306 = vld [vmem:[#allocation2 + $0x6b8] sm:$0xff]
    %v307 = vld [vmem:[#allocation2 + $0x6c0] sm:$0xff]
    %v308 = vld [vmem:[#allocation2 + $0x6c8] sm:$0xff]
    %v309 = vld [vmem:[#allocation2 + $0x6d0] sm:$0xff]
    %v310 = vld [vmem:[#allocation2 + $0x6d8] sm:$0xff]
    %v311 = vld [vmem:[#allocation2 + $0x6e0] sm:$0xff]
    %v312 = vld [vmem:[#allocation2 + $0x6e8] sm:$0xff]
    %v313 = vld [vmem:[#allocation2 + $0x6f0] sm:$0xff]
    %v314 = vld [vmem:[#allocation2 + $0x6f8] sm:$0xff]
    %v315 = vld [vmem:[#allocation2 + $0x700] sm:$0xff]
    %v316 = vld [vmem:[#allocation2 + $0x708] sm:$0xff]
    %v317 = vld [vmem:[#allocation2 + $0x710] sm:$0xff]
    %v318 = vld [vmem:[#allocation2 + $0x718] sm:$0xff]
    %v319 = vld [vmem:[#allocation2 + $0x720] sm:$0xff]
    %v320 = vld [vmem:[#allocation2 + $0x728] sm:$0xff]
    %v321 = vld [vmem:[#allocation2 + $0x730] sm:$0xff]
    %v322 = vld [vmem:[#allocation2 + $0x738] sm:$0xff]
    %v323 = vld [vmem:[#allocation2 + $0x740] sm:$0xff]
    %v324 = vld [vmem:[#allocation2 + $0x748] sm:$0xff]
    %v325 = vld [vmem:[#allocation2 + $0x750] sm:$0xff]
    %v326 = vld [vmem:[#allocation2 + $0x758] sm:$0xff]
    %v327 = vld [vmem:[#allocation2 + $0x760] sm:$0xff]
    %v328 = vld [vmem:[#allocation2 + $0x768] sm:$0xff]
    %v329 = vld [vmem:[#allocation2 + $0x770] sm:$0xff]
    %v330 = vld [vmem:[#allocation2 + $0x778] sm:$0xff]
    %v331 = vld [vmem:[#allocation2 + $0x780] sm:$0xff]
    %v332 = vld [vmem:[#allocation2 + $0x788] sm:$0xff]
    %v333 = vld [vmem:[#allocation2 + $0x790] sm:$0xff]
    %v334 = vld [vmem:[#allocation2 + $0x798] sm:$0xff]
    %v335 = vld [vmem:[#allocation2 + $0x7a0] sm:$0xff]
    %v336 = vld [vmem:[#allocation2 + $0x7a8] sm:$0xff]
    %v337 = vld [vmem:[#allocation2 + $0x7b0] sm:$0xff]
    %v338 = vld [vmem:[#allocation2 + $0x7b8] sm:$0xff]
    %v339 = vld [vmem:[#allocation2 + $0x7c0] sm:$0xff]
    %v340 = vld [vmem:[#allocation2 + $0x7c8] sm:$0xff]
    %v341 = vld [vmem:[#allocation2 + $0x7d0] sm:$0xff]
    %v342 = vld [vmem:[#allocation2 + $0x7d8] sm:$0xff]
    %v343 = vld [vmem:[#allocation2 + $0x7e0] sm:$0xff]
    %v344 = vld [vmem:[#allocation2 + $0x7e8] sm:$0xff]
    %v345 = vld [vmem:[#allocation2 + $0x7f0] sm:$0xff]
    %v346 = vld [vmem:[#allocation2 + $0x7f8] sm:$0xff]
    %v347 = vld [vmem:[#allocation2 + $0x800] sm:$0xff]
    %v348 = vld [vmem:[#allocation2 + $0x808] sm:$0xff]
    %v349 = vld [vmem:[#allocation2 + $0x810] sm:$0xff]
    %v350 = vld [vmem:[#allocation2 + $0x818] sm:$0xff]
    %v351 = vld [vmem:[#allocation2 + $0x820] sm:$0xff]
    %v352 = vld [vmem:[#allocation2 + $0x828] sm:$0xff]
    %v353 = vld [vmem:[#allocation2 + $0x830] sm:$0xff]
    %v354 = vld [vmem:[#allocation2 + $0x838] sm:$0xff]
    %v355 = vld [vmem:[#allocation2 + $0x840] sm:$0xff]
    %v356 = vld [vmem:[#allocation2 + $0x848] sm:$0xff]
    %v357 = vld [vmem:[#allocation2 + $0x850] sm:$0xff]
    %v358 = vld [vmem:[#allocation2 + $0x858] sm:$0xff]
    %v359 = vld [vmem:[#allocation2 + $0x860] sm:$0xff]
    %v360 = vld [vmem:[#allocation2 + $0x868] sm:$0xff]
    %v361 = vld [vmem:[#allocation2 + $0x870] sm:$0xff]
    %v362 = vld [vmem:[#allocation2 + $0x878] sm:$0xff]
    %v363 = vld [vmem:[#allocation2 + $0x880] sm:$0xff]
    %v364 = vld [vmem:[#allocation2 + $0x888] sm:$0xff]
    %v365 = vld [vmem:[#allocation2 + $0x890] sm:$0xff]
    %v366 = vld [vmem:[#allocation2 + $0x898] sm:$0xff]
    %v367 = vld [vmem:[#allocation2 + $0x8a0] sm:$0xff]
    %v368 = vld [vmem:[#allocation2 + $0x8a8] sm:$0xff]
    %v369 = vld [vmem:[#allocation2 + $0x8b0] sm:$0xff]
    %v370 = vld [vmem:[#allocation2 + $0x8b8] sm:$0xff]
    %v371 = vld [vmem:[#allocation2 + $0x8c0] sm:$0xff]
    %v372 = vld [vmem:[#allocation2 + $0x8c8] sm:$0xff]
    %v373 = vld [vmem:[#allocation2 + $0x8d0] sm:$0xff]
    %v374 = vld [vmem:[#allocation2 + $0x8d8] sm:$0xff]
    %v375 = vld [vmem:[#allocation2 + $0x8e0] sm:$0xff]
    %v376 = vld [vmem:[#allocation2 + $0x8e8] sm:$0xff]
    %v377 = vld [vmem:[#allocation2 + $0x8f0] sm:$0xff]
    %v378 = vld [vmem:[#allocation2 + $0x8f8] sm:$0xff]
    %v379 = vld [vmem:[#allocation2 + $0x900] sm:$0xff]
    %v380 = vld [vmem:[#allocation2 + $0x908] sm:$0xff]
    %v381 = vld [vmem:[#allocation2 + $0x910] sm:$0xff]
    %v382 = vld [vmem:[#allocation2 + $0x918] sm:$0xff]
    %v383 = vld [vmem:[#allocation2 + $0x920] sm:$0xff]
    %v384 = vld [vmem:[#allocation2 + $0x928] sm:$0xff]
    %v385 = vld [vmem:[#allocation2 + $0x930] sm:$0xff]
    %v386 = vld [vmem:[#allocation2 + $0x938] sm:$0xff]
    %v387 = vld [vmem:[#allocation2 + $0x940] sm:$0xff]
    %v388 = vld [vmem:[#allocation2 + $0x948] sm:$0xff]
    %v389 = vld [vmem:[#allocation2 + $0x950] sm:$0xff]
    %v390 = vld [vmem:[#allocation2 + $0x958] sm:$0xff]
    %v391 = vld [vmem:[#allocation2 + $0x960] sm:$0xff]
    %v392 = vld [vmem:[#allocation2 + $0x968] sm:$0xff]
    %v393 = vld [vmem:[#allocation2 + $0x970] sm:$0xff]
    %v394 = vld [vmem:[#allocation2 + $0x978] sm:$0xff]
    %v395 = vld [vmem:[#allocation2 + $0x980] sm:$0xff]
    %v396 = vld [vmem:[#allocation2 + $0x988] sm:$0xff]
    %v397 = vld [vmem:[#allocation2 + $0x990] sm:$0xff]
    %v398 = vld [vmem:[#allocation2 + $0x998] sm:$0xff]
    %v399 = vld [vmem:[#allocation2 + $0x9a0] sm:$0xff]
    %v400 = vld [vmem:[#allocation2 + $0x9a8] sm:$0xff]
    %v401 = vld [vmem:[#allocation2 + $0x9b0] sm:$0xff]
    %v402 = vld [vmem:[#allocation2 + $0x9b8] sm:$0xff]
    %v403 = vld [vmem:[#allocation2 + $0x9c0] sm:$0xff]
    %v404 = vld [vmem:[#allocation2 + $0x9c8] sm:$0xff]
    %v405 = vld [vmem:[#allocation2 + $0x9d0] sm:$0xff]
    %v406 = vld [vmem:[#allocation2 + $0x9d8] sm:$0xff]
    %v407 = vld [vmem:[#allocation2 + $0x9e0] sm:$0xff]
    %v408 = vld [vmem:[#allocation2 + $0x9e8] sm:$0xff]
    %v409 = vld [vmem:[#allocation2 + $0x9f0] sm:$0xff]
    %v410 = vld [vmem:[#allocation2 + $0x9f8] sm:$0xff]
    %v411 = vld [vmem:[#allocation2 + $0xa00] sm:$0xff]
    %v412 = vld [vmem:[#allocation2 + $0xa08] sm:$0xff]
    %v413 = vld [vmem:[#allocation2 + $0xa10] sm:$0xff]
    %v414 = vld [vmem:[#allocation2 + $0xa18] sm:$0xff]
    %v415 = vld [vmem:[#allocation2 + $0xa20] sm:$0xff]
    %v416 = vld [vmem:[#allocation2 + $0xa28] sm:$0xff]
    %v417 = vld [vmem:[#allocation2 + $0xa30] sm:$0xff]
    %v418 = vld [vmem:[#allocation2 + $0xa38] sm:$0xff]
    %v419 = vld [vmem:[#allocation2 + $0xa40] sm:$0xff]
    %v420 = vld [vmem:[#allocation2 + $0xa48] sm:$0xff]
    %v421 = vld [vmem:[#allocation2 + $0xa50] sm:$0xff]
    %v422 = vld [vmem:[#allocation2 + $0xa58] sm:$0xff]
    %v423 = vld [vmem:[#allocation2 + $0xa60] sm:$0xff]
    %v424 = vld [vmem:[#allocation2 + $0xa68] sm:$0xff]
    %v425 = vld [vmem:[#allocation2 + $0xa70] sm:$0xff]
    %v426 = vld [vmem:[#allocation2 + $0xa78] sm:$0xff]
    %v427 = vld [vmem:[#allocation2 + $0xa80] sm:$0xff]
    %v428 = vld [vmem:[#allocation2 + $0xa88] sm:$0xff]
    %v429 = vld [vmem:[#allocation2 + $0xa90] sm:$0xff]
    %v430 = vld [vmem:[#allocation2 + $0xa98] sm:$0xff]
    %v431 = vld [vmem:[#allocation2 + $0xaa0] sm:$0xff]
    %v432 = vld [vmem:[#allocation2 + $0xaa8] sm:$0xff]
    %v433 = vld [vmem:[#allocation2 + $0xab0] sm:$0xff]
    %v434 = vld [vmem:[#allocation2 + $0xab8] sm:$0xff]
    %v435 = vld [vmem:[#allocation2 + $0xac0] sm:$0xff]
    %v436 = vld [vmem:[#allocation2 + $0xac8] sm:$0xff]
    %v437 = vld [vmem:[#allocation2 + $0xad0] sm:$0xff]
    %v438 = vld [vmem:[#allocation2 + $0xad8] sm:$0xff]
    %v439 = vld [vmem:[#allocation2 + $0xae0] sm:$0xff]
    %v440 = vld [vmem:[#allocation2 + $0xae8] sm:$0xff]
    %v441 = vld [vmem:[#allocation2 + $0xaf0] sm:$0xff]
    %v442 = vld [vmem:[#allocation2 + $0xaf8] sm:$0xff]
    %v443 = vld [vmem:[#allocation2 + $0xb00] sm:$0xff]
    %v444 = vld [vmem:[#allocation2 + $0xb08] sm:$0xff]
    %v445 = vld [vmem:[#allocation2 + $0xb10] sm:$0xff]
    %v446 = vld [vmem:[#allocation2 + $0xb18] sm:$0xff]
    %v447 = vld [vmem:[#allocation2 + $0xb20] sm:$0xff]
    %v448 = vld [vmem:[#allocation2 + $0xb28] sm:$0xff]
    %v449 = vld [vmem:[#allocation2 + $0xb30] sm:$0xff]
    %v450 = vld [vmem:[#allocation2 + $0xb38] sm:$0xff]
    %v451 = vld [vmem:[#allocation2 + $0xb40] sm:$0xff]
    %v452 = vld [vmem:[#allocation2 + $0xb48] sm:$0xff]
    %v453 = vld [vmem:[#allocation2 + $0xb50] sm:$0xff]
    %v454 = vld [vmem:[#allocation2 + $0xb58] sm:$0xff]
    %v455 = vld [vmem:[#allocation2 + $0xb60] sm:$0xff]
    %v456 = vld [vmem:[#allocation2 + $0xb68] sm:$0xff]
    %v457 = vld [vmem:[#allocation2 + $0xb70] sm:$0xff]
    %v458 = vld [vmem:[#allocation2 + $0xb78] sm:$0xff]
    %v459 = vld [vmem:[#allocation2 + $0xb80] sm:$0xff]
    %v460 = vld [vmem:[#allocation2 + $0xb88] sm:$0xff]
    %v461 = vld [vmem:[#allocation2 + $0xb90] sm:$0xff]
    %v462 = vld [vmem:[#allocation2 + $0xb98] sm:$0xff]
    %v463 = vld [vmem:[#allocation2 + $0xba0] sm:$0xff]
    %v464 = vld [vmem:[#allocation2 + $0xba8] sm:$0xff]
    %v465 = vld [vmem:[#allocation2 + $0xbb0] sm:$0xff]
    %v466 = vld [vmem:[#allocation2 + $0xbb8] sm:$0xff]
    %v467 = vld [vmem:[#allocation2 + $0xbc0] sm:$0xff]
    %v468 = vld [vmem:[#allocation2 + $0xbc8] sm:$0xff]
    %v469 = vld [vmem:[#allocation2 + $0xbd0] sm:$0xff]
    %v470 = vld [vmem:[#allocation2 + $0xbd8] sm:$0xff]
    %v471 = vld [vmem:[#allocation2 + $0xbe0] sm:$0xff]
    %v472 = vld [vmem:[#allocation2 + $0xbe8] sm:$0xff]
    %v473 = vld [vmem:[#allocation2 + $0xbf0] sm:$0xff]
    %v474 = vld [vmem:[#allocation2 + $0xbf8] sm:$0xff]
    %v475 = vld [vmem:[#allocation2 + $0xc00] sm:$0xff]
    %v476 = vld [vmem:[#allocation2 + $0xc08] sm:$0xff]
    %v477 = vld [vmem:[#allocation2 + $0xc10] sm:$0xff]
    %v478 = vld [vmem:[#allocation2 + $0xc18] sm:$0xff]
    %v479 = vld [vmem:[#allocation2 + $0xc20] sm:$0xff]
    %v480 = vld [vmem:[#allocation2 + $0xc28] sm:$0xff]
    %v481 = vld [vmem:[#allocation2 + $0xc30] sm:$0xff]
    %v482 = vld [vmem:[#allocation2 + $0xc38] sm:$0xff]
    %v483 = vld [vmem:[#allocation2 + $0xc40] sm:$0xff]
    %v484 = vld [vmem:[#allocation2 + $0xc48] sm:$0xff]
    %v485 = vld [vmem:[#allocation2 + $0xc50] sm:$0xff]
    %v486 = vld [vmem:[#allocation2 + $0xc58] sm:$0xff]
    %v487 = vld [vmem:[#allocation2 + $0xc60] sm:$0xff]
    %v488 = vld [vmem:[#allocation2 + $0xc68] sm:$0xff]
    %v489 = vld [vmem:[#allocation2 + $0xc70] sm:$0xff]
    %v490 = vld [vmem:[#allocation2 + $0xc78] sm:$0xff]
    %v491 = vld [vmem:[#allocation2 + $0xc80] sm:$0xff]
    %v492 = vld [vmem:[#allocation2 + $0xc88] sm:$0xff]
    %v493 = vld [vmem:[#allocation2 + $0xc90] sm:$0xff]
    %v494 = vld [vmem:[#allocation2 + $0xc98] sm:$0xff]
    %v495 = vld [vmem:[#allocation2 + $0xca0] sm:$0xff]
    %v496 = vld [vmem:[#allocation2 + $0xca8] sm:$0xff]
    %v497 = vld [vmem:[#allocation2 + $0xcb0] sm:$0xff]
    %v498 = vld [vmem:[#allocation2 + $0xcb8] sm:$0xff]
    %v499 = vld [vmem:[#allocation2 + $0xcc0] sm:$0xff]
    %v500 = vld [vmem:[#allocation2 + $0xcc8] sm:$0xff]
    %v501 = vld [vmem:[#allocation2 + $0xcd0] sm:$0xff]
    %v502 = vld [vmem:[#allocation2 + $0xcd8] sm:$0xff]
    %v503 = vld [vmem:[#allocation2 + $0xce0] sm:$0xff]
    %v504 = vld [vmem:[#allocation2 + $0xce8] sm:$0xff]
    %v505 = vld [vmem:[#allocation2 + $0xcf0] sm:$0xff]
    %v506 = vld [vmem:[#allocation2 + $0xcf8] sm:$0xff]
    %v507 = vld [vmem:[#allocation2 + $0xd00] sm:$0xff]
    %v508 = vld [vmem:[#allocation2 + $0xd08] sm:$0xff]
    %v509 = vld [vmem:[#allocation2 + $0xd10] sm:$0xff]
    %v510 = vld [vmem:[#allocation2 + $0xd18] sm:$0xff]
    %v511 = vld [vmem:[#allocation2 + $0xd20] sm:$0xff]
    %v512 = vld [vmem:[#allocation2 + $0xd28] sm:$0xff]
    %v513 = vld [vmem:[#allocation2 + $0xd30] sm:$0xff]
    %v514 = vld [vmem:[#allocation2 + $0xd38] sm:$0xff]
    %v515 = vld [vmem:[#allocation2 + $0xd40] sm:$0xff]
    %v516 = vld [vmem:[#allocation2 + $0xd48] sm:$0xff]
    %v517 = vld [vmem:[#allocation2 + $0xd50] sm:$0xff]
    %v518 = vld [vmem:[#allocation2 + $0xd58] sm:$0xff]
    %v519 = vld [vmem:[#allocation2 + $0xd60] sm:$0xff]
    %v520 = vld [vmem:[#allocation2 + $0xd68] sm:$0xff]
    %v521 = vld [vmem:[#allocation2 + $0xd70] sm:$0xff]
    %v522 = vld [vmem:[#allocation2 + $0xd78] sm:$0xff]
    %v523 = vld [vmem:[#allocation2 + $0xd80] sm:$0xff]
    %v524 = vld [vmem:[#allocation2 + $0xd88] sm:$0xff]
    %v525 = vld [vmem:[#allocation2 + $0xd90] sm:$0xff]
    %v526 = vld [vmem:[#allocation2 + $0xd98] sm:$0xff]
    %v527 = vld [vmem:[#allocation2 + $0xda0] sm:$0xff]
    %v528 = vld [vmem:[#allocation2 + $0xda8] sm:$0xff]
    %v529 = vld [vmem:[#allocation2 + $0xdb0] sm:$0xff]
    %v530 = vld [vmem:[#allocation2 + $0xdb8] sm:$0xff]
    %v531 = vld [vmem:[#allocation2 + $0xdc0] sm:$0xff]
    %v532 = vld [vmem:[#allocation2 + $0xdc8] sm:$0xff]
    %v533 = vld [vmem:[#allocation2 + $0xdd0] sm:$0xff]
    %v534 = vld [vmem:[#allocation2 + $0xdd8] sm:$0xff]
    %v535 = vld [vmem:[#allocation2 + $0xde0] sm:$0xff]
    %v536 = vld [vmem:[#allocation2 + $0xde8] sm:$0xff]
    %v537 = vld [vmem:[#allocation2 + $0xdf0] sm:$0xff]
    %v538 = vld [vmem:[#allocation2 + $0xdf8] sm:$0xff]
    %v539 = vld [vmem:[#allocation2 + $0xe00] sm:$0xff]
    %v540 = vld [vmem:[#allocation2 + $0xe08] sm:$0xff]
    %v541 = vld [vmem:[#allocation2 + $0xe10] sm:$0xff]
    %v542 = vld [vmem:[#allocation2 + $0xe18] sm:$0xff]
    %v543 = vld [vmem:[#allocation2 + $0xe20] sm:$0xff]
    %v544 = vld [vmem:[#allocation2 + $0xe28] sm:$0xff]
    %v545 = vld [vmem:[#allocation2 + $0xe30] sm:$0xff]
    %v546 = vld [vmem:[#allocation2 + $0xe38] sm:$0xff]
    %v547 = vld [vmem:[#allocation2 + $0xe40] sm:$0xff]
    %v548 = vld [vmem:[#allocation2 + $0xe48] sm:$0xff]
    %v549 = vld [vmem:[#allocation2 + $0xe50] sm:$0xff]
    %v550 = vld [vmem:[#allocation2 + $0xe58] sm:$0xff]
    %v551 = vld [vmem:[#allocation2 + $0xe60] sm:$0xff]
    %v552 = vld [vmem:[#allocation2 + $0xe68] sm:$0xff]
    %v553 = vld [vmem:[#allocation2 + $0xe70] sm:$0xff]
    %v554 = vld [vmem:[#allocation2 + $0xe78] sm:$0xff]
    %v555 = vld [vmem:[#allocation2 + $0xe80] sm:$0xff]
    %v556 = vld [vmem:[#allocation2 + $0xe88] sm:$0xff]
    %v557 = vld [vmem:[#allocation2 + $0xe90] sm:$0xff]
    %v558 = vld [vmem:[#allocation2 + $0xe98] sm:$0xff]
    %v559 = vld [vmem:[#allocation2 + $0xea0] sm:$0xff]
    %v560 = vld [vmem:[#allocation2 + $0xea8] sm:$0xff]
    %v561 = vld [vmem:[#allocation2 + $0xeb0] sm:$0xff]
    %v562 = vld [vmem:[#allocation2 + $0xeb8] sm:$0xff]
    %v563 = vld [vmem:[#allocation2 + $0xec0] sm:$0xff]
    %v564 = vld [vmem:[#allocation2 + $0xec8] sm:$0xff]
    %v565 = vld [vmem:[#allocation2 + $0xed0] sm:$0xff]
    %v566 = vld [vmem:[#allocation2 + $0xed8] sm:$0xff]
    %v567 = vld [vmem:[#allocation2 + $0xee0] sm:$0xff]
    %v568 = vld [vmem:[#allocation2 + $0xee8] sm:$0xff]
    %v569 = vld [vmem:[#allocation2 + $0xef0] sm:$0xff]
    %v570 = vld [vmem:[#allocation2 + $0xef8] sm:$0xff]
    %571 = vmatprep.subr.mxu0 %v92
    %572 = vmatpush1.msra.mxu0 %v91
    %573 = vmatprep.subr.mxu0 %v107
    %574 = vmatpush1.msra.mxu0 %v106
    %575 = vmatprep.subr.mxu0 %v122
    %576 = vmatpush1.msra.mxu0 %v121
    %577 = vmatprep.subr.mxu0 %v137
    %578 = vmatpush1.msra.mxu0 %v136
    %579 = vmatprep.subr.mxu0 %v152
    %580 = vmatpush1.msra.mxu0 %v151
    %581 = vmatprep.subr.mxu0 %v167
    %582 = vmatpush1.msra.mxu0 %v166
    %583 = vmatprep.subr.mxu0 %v182
    %584 = vmatpush1.msra.mxu0 %v181
    %585 = vmatprep.subr.mxu0 %v197
    %586 = vmatpush1.msra.mxu0 %v196
    %587 = vmatprep.subr.mxu0 %v212
    %588 = vmatpush1.msra.mxu0 %v211
    %589 = vmatprep.subr.mxu0 %v227
    %590 = vmatpush1.msra.mxu0 %v226
    %591 = vmatprep.subr.mxu0 %v242
    %592 = vmatpush1.msra.mxu0 %v241
    %593 = vmatprep.subr.mxu0 %v257
    %594 = vmatpush1.msra.mxu0 %v256
    %595 = vmatprep.subr.mxu0 %v272
    %596 = vmatpush1.msra.mxu0 %v271
    %597 = vmatprep.subr.mxu0 %v287
    %598 = vmatpush1.msra.mxu0 %v286
    %599 = vmatprep.subr.mxu0 %v302
    %600 = vmatpush1.msra.mxu0 %v301
    %601 = vmatprep.subr.mxu0 %v317
    %602 = vmatpush1.msra.mxu0 %v316
    %603 = vmatprep.subr.mxu0 %v332
    %604 = vmatpush1.msra.mxu0 %v331
    %605 = vmatprep.subr.mxu0 %v347
    %606 = vmatpush1.msra.mxu0 %v346
    %607 = vmatprep.subr.mxu0 %v362
    %608 = vmatpush1.msra.mxu0 %v361
    %609 = vmatprep.subr.mxu0 %v377
    %610 = vmatpush1.msra.mxu0 %v376
    %611 = vmatprep.subr.mxu0 %v392
    %612 = vmatpush1.msra.mxu0 %v391
    %613 = vmatprep.subr.mxu0 %v407
    %614 = vmatpush1.msra.mxu0 %v406
    %615 = vmatprep.subr.mxu0 %v422
    %616 = vmatpush1.msra.mxu0 %v421
    %617 = vmatprep.subr.mxu0 %v437
    %618 = vmatpush1.msra.mxu0 %v436
    %619 = vmatprep.subr.mxu0 %v452
    %620 = vmatpush1.msra.mxu0 %v451
    %621 = vmatprep.subr.mxu0 %v467
    %622 = vmatpush1.msra.mxu0 %v466
    %623 = vmatprep.subr.mxu0 %v482
    %624 = vmatpush1.msra.mxu0 %v481
    %625 = vmatprep.subr.mxu0 %v497
    %626 = vmatpush1.msra.mxu0 %v496
    %627 = vmatprep.subr.mxu0 %v512
    %628 = vmatpush1.msra.mxu0 %v511
    %629 = vmatprep.subr.mxu0 %v527
    %630 = vmatpush1.msra.mxu0 %v526
    %631 = vmatprep.subr.mxu0 %v542
    %632 = vmatpush1.msra.mxu0 %v541
    %633 = vmatprep.subr.mxu0 %v557
    %634 = vmatpush1.msra.mxu0 %v556
    %635 = vmatprep.mubr.f32.mxu0 %v90
    %636 = vmatmul.mubr.f32.gmra.mrb[0].mxu0 %v89
    %v637 = vpop.f32.mrb[0].mxu0
    %v638 = vadd.f32 0.0, %v637
    %v639 = vpop.f32.mrb[0].mxu0
    %v640 = vadd.f32 0.0, %v639
    %641 = vdwg.mxu0
    %642 = vmatprep.subr.mxu0 %v94
    %643 = vmatpush1.msra.mxu0 %v93
    %644 = vmatprep.subr.mxu0 %v109
    %645 = vmatpush1.msra.mxu0 %v108
    %646 = vmatprep.subr.mxu0 %v124
    %647 = vmatpush1.msra.mxu0 %v123
    %648 = vmatprep.subr.mxu0 %v139
    %649 = vmatpush1.msra.mxu0 %v138
    %650 = vmatprep.subr.mxu0 %v154
    %651 = vmatpush1.msra.mxu0 %v153
    %652 = vmatprep.subr.mxu0 %v169
    %653 = vmatpush1.msra.mxu0 %v168
    %654 = vmatprep.subr.mxu0 %v184
    %655 = vmatpush1.msra.mxu0 %v183
    %656 = vmatprep.subr.mxu0 %v199
    %657 = vmatpush1.msra.mxu0 %v198
    %658 = vmatprep.subr.mxu0 %v214
    %659 = vmatpush1.msra.mxu0 %v213
    %660 = vmatprep.subr.mxu0 %v229
    %661 = vmatpush1.msra.mxu0 %v228
    %662 = vmatprep.subr.mxu0 %v244
    %663 = vmatpush1.msra.mxu0 %v243
    %664 = vmatprep.subr.mxu0 %v259
    %665 = vmatpush1.msra.mxu0 %v258
    %666 = vmatprep.subr.mxu0 %v274
    %667 = vmatpush1.msra.mxu0 %v273
    %668 = vmatprep.subr.mxu0 %v289
    %669 = vmatpush1.msra.mxu0 %v288
    %670 = vmatprep.subr.mxu0 %v304
    %671 = vmatpush1.msra.mxu0 %v303
    %672 = vmatprep.subr.mxu0 %v319
    %673 = vmatpush1.msra.mxu0 %v318
    %674 = vmatprep.subr.mxu0 %v334
    %675 = vmatpush1.msra.mxu0 %v333
    %676 = vmatprep.subr.mxu0 %v349
    %677 = vmatpush1.msra.mxu0 %v348
    %678 = vmatprep.subr.mxu0 %v364
    %679 = vmatpush1.msra.mxu0 %v363
    %680 = vmatprep.subr.mxu0 %v379
    %681 = vmatpush1.msra.mxu0 %v378
    %682 = vmatprep.subr.mxu0 %v394
    %683 = vmatpush1.msra.mxu0 %v393
    %684 = vmatprep.subr.mxu0 %v409
    %685 = vmatpush1.msra.mxu0 %v408
    %686 = vmatprep.subr.mxu0 %v424
    %687 = vmatpush1.msra.mxu0 %v423
    %688 = vmatprep.subr.mxu0 %v439
    %689 = vmatpush1.msra.mxu0 %v438
    %690 = vmatprep.subr.mxu0 %v454
    %691 = vmatpush1.msra.mxu0 %v453
    %692 = vmatprep.subr.mxu0 %v469
    %693 = vmatpush1.msra.mxu0 %v468
    %694 = vmatprep.subr.mxu0 %v484
    %695 = vmatpush1.msra.mxu0 %v483
    %696 = vmatprep.subr.mxu0 %v499
    %697 = vmatpush1.msra.mxu0 %v498
    %698 = vmatprep.subr.mxu0 %v514
    %699 = vmatpush1.msra.mxu0 %v513
    %700 = vmatprep.subr.mxu0 %v529
    %701 = vmatpush1.msra.mxu0 %v528
    %702 = vmatprep.subr.mxu0 %v544
    %703 = vmatpush1.msra.mxu0 %v543
    %704 = vmatprep.subr.mxu0 %v559
    %705 = vmatpush1.msra.mxu0 %v558
    %706 = vmatprep.mubr.f32.mxu0 %v90
    %707 = vmatmul.mubr.f32.gmra.mrb[0].mxu0 %v89
    %v708 = vpop.f32.mrb[0].mxu0
    %v709 = vadd.f32 0.0, %v708
    %v710 = vpop.f32.mrb[0].mxu0
    %v711 = vadd.f32 0.0, %v710
    %712 = vdwg.mxu0
    %713 = vmatprep.subr.mxu0 %v96
    %714 = vmatpush1.msra.mxu0 %v95
    %715 = vmatprep.subr.mxu0 %v111
    %716 = vmatpush1.msra.mxu0 %v110
    %717 = vmatprep.subr.mxu0 %v126
    %718 = vmatpush1.msra.mxu0 %v125
    %719 = vmatprep.subr.mxu0 %v141
    %720 = vmatpush1.msra.mxu0 %v140
    %721 = vmatprep.subr.mxu0 %v156
    %722 = vmatpush1.msra.mxu0 %v155
    %723 = vmatprep.subr.mxu0 %v171
    %724 = vmatpush1.msra.mxu0 %v170
    %725 = vmatprep.subr.mxu0 %v186
    %726 = vmatpush1.msra.mxu0 %v185
    %727 = vmatprep.subr.mxu0 %v201
    %728 = vmatpush1.msra.mxu0 %v200
    %729 = vmatprep.subr.mxu0 %v216
    %730 = vmatpush1.msra.mxu0 %v215
    %731 = vmatprep.subr.mxu0 %v231
    %732 = vmatpush1.msra.mxu0 %v230
    %733 = vmatprep.subr.mxu0 %v246
    %734 = vmatpush1.msra.mxu0 %v245
    %735 = vmatprep.subr.mxu0 %v261
    %736 = vmatpush1.msra.mxu0 %v260
    %737 = vmatprep.subr.mxu0 %v276
    %738 = vmatpush1.msra.mxu0 %v275
    %739 = vmatprep.subr.mxu0 %v291
    %740 = vmatpush1.msra.mxu0 %v290
    %741 = vmatprep.subr.mxu0 %v306
    %742 = vmatpush1.msra.mxu0 %v305
    %743 = vmatprep.subr.mxu0 %v321
    %744 = vmatpush1.msra.mxu0 %v320
    %745 = vmatprep.subr.mxu0 %v336
    %746 = vmatpush1.msra.mxu0 %v335
    %747 = vmatprep.subr.mxu0 %v351
    %748 = vmatpush1.msra.mxu0 %v350
    %749 = vmatprep.subr.mxu0 %v366
    %750 = vmatpush1.msra.mxu0 %v365
    %751 = vmatprep.subr.mxu0 %v381
    %752 = vmatpush1.msra.mxu0 %v380
    %753 = vmatprep.subr.mxu0 %v396
    %754 = vmatpush1.msra.mxu0 %v395
    %755 = vmatprep.subr.mxu0 %v411
    %756 = vmatpush1.msra.mxu0 %v410
    %757 = vmatprep.subr.mxu0 %v426
    %758 = vmatpush1.msra.mxu0 %v425
    %759 = vmatprep.subr.mxu0 %v441
    %760 = vmatpush1.msra.mxu0 %v440
    %761 = vmatprep.subr.mxu0 %v456
    %762 = vmatpush1.msra.mxu0 %v455
    %763 = vmatprep.subr.mxu0 %v471
    %764 = vmatpush1.msra.mxu0 %v470
    %765 = vmatprep.subr.mxu0 %v486
    %766 = vmatpush1.msra.mxu0 %v485
    %767 = vmatprep.subr.mxu0 %v501
    %768 = vmatpush1.msra.mxu0 %v500
    %769 = vmatprep.subr.mxu0 %v516
    %770 = vmatpush1.msra.mxu0 %v515
    %771 = vmatprep.subr.mxu0 %v531
    %772 = vmatpush1.msra.mxu0 %v530
    %773 = vmatprep.subr.mxu0 %v546
    %774 = vmatpush1.msra.mxu0 %v545
    %775 = vmatprep.subr.mxu0 %v561
    %776 = vmatpush1.msra.mxu0 %v560
    %777 = vmatprep.mubr.f32.mxu0 %v90
    %778 = vmatmul.mubr.f32.gmra.mrb[0].mxu0 %v89
    %v779 = vpop.f32.mrb[0].mxu0
    %v780 = vadd.f32 0.0, %v779
    %v781 = vpop.f32.mrb[0].mxu0
    %v782 = vadd.f32 0.0, %v781
    %783 = vdwg.mxu0
    %784 = vmatprep.subr.mxu0 %v98
    %785 = vmatpush1.msra.mxu0 %v97
    %786 = vmatprep.subr.mxu0 %v113
    %787 = vmatpush1.msra.mxu0 %v112
    %788 = vmatprep.subr.mxu0 %v128
    %789 = vmatpush1.msra.mxu0 %v127
    %790 = vmatprep.subr.mxu0 %v143
    %791 = vmatpush1.msra.mxu0 %v142
    %792 = vmatprep.subr.mxu0 %v158
    %793 = vmatpush1.msra.mxu0 %v157
    %794 = vmatprep.subr.mxu0 %v173
    %795 = vmatpush1.msra.mxu0 %v172
    %796 = vmatprep.subr.mxu0 %v188
    %797 = vmatpush1.msra.mxu0 %v187
    %798 = vmatprep.subr.mxu0 %v203
    %799 = vmatpush1.msra.mxu0 %v202
    %800 = vmatprep.subr.mxu0 %v218
    %801 = vmatpush1.msra.mxu0 %v217
    %802 = vmatprep.subr.mxu0 %v233
    %803 = vmatpush1.msra.mxu0 %v232
    %804 = vmatprep.subr.mxu0 %v248
    %805 = vmatpush1.msra.mxu0 %v247
    %806 = vmatprep.subr.mxu0 %v263
    %807 = vmatpush1.msra.mxu0 %v262
    %808 = vmatprep.subr.mxu0 %v278
    %809 = vmatpush1.msra.mxu0 %v277
    %810 = vmatprep.subr.mxu0 %v293
    %811 = vmatpush1.msra.mxu0 %v292
    %812 = vmatprep.subr.mxu0 %v308
    %813 = vmatpush1.msra.mxu0 %v307
    %814 = vmatprep.subr.mxu0 %v323
    %815 = vmatpush1.msra.mxu0 %v322
    %816 = vmatprep.subr.mxu0 %v338
    %817 = vmatpush1.msra.mxu0 %v337
    %818 = vmatprep.subr.mxu0 %v353
    %819 = vmatpush1.msra.mxu0 %v352
    %820 = vmatprep.subr.mxu0 %v368
    %821 = vmatpush1.msra.mxu0 %v367
    %822 = vmatprep.subr.mxu0 %v383
    %823 = vmatpush1.msra.mxu0 %v382
    %824 = vmatprep.subr.mxu0 %v398
    %825 = vmatpush1.msra.mxu0 %v397
    %826 = vmatprep.subr.mxu0 %v413
    %827 = vmatpush1.msra.mxu0 %v412
    %828 = vmatprep.subr.mxu0 %v428
    %829 = vmatpush1.msra.mxu0 %v427
    %830 = vmatprep.subr.mxu0 %v443
    %831 = vmatpush1.msra.mxu0 %v442
    %832 = vmatprep.subr.mxu0 %v458
    %833 = vmatpush1.msra.mxu0 %v457
    %834 = vmatprep.subr.mxu0 %v473
    %835 = vmatpush1.msra.mxu0 %v472
    %836 = vmatprep.subr.mxu0 %v488
    %837 = vmatpush1.msra.mxu0 %v487
    %838 = vmatprep.subr.mxu0 %v503
    %839 = vmatpush1.msra.mxu0 %v502
    %840 = vmatprep.subr.mxu0 %v518
    %841 = vmatpush1.msra.mxu0 %v517
    %842 = vmatprep.subr.mxu0 %v533
    %843 = vmatpush1.msra.mxu0 %v532
    %844 = vmatprep.subr.mxu0 %v548
    %845 = vmatpush1.msra.mxu0 %v547
    %846 = vmatprep.subr.mxu0 %v563
    %847 = vmatpush1.msra.mxu0 %v562
    %848 = vmatprep.mubr.f32.mxu0 %v90
    %849 = vmatmul.mubr.f32.gmra.mrb[0].mxu0 %v89
    %v850 = vpop.f32.mrb[0].mxu0
    %v851 = vadd.f32 0.0, %v850
    %v852 = vpop.f32.mrb[0].mxu0
    %v853 = vadd.f32 0.0, %v852
    %854 = vdwg.mxu0
    %855 = vmatprep.subr.mxu0 %v100
    %856 = vmatpush1.msra.mxu0 %v99
    %857 = vmatprep.subr.mxu0 %v115
    %858 = vmatpush1.msra.mxu0 %v114
    %859 = vmatprep.subr.mxu0 %v130
    %860 = vmatpush1.msra.mxu0 %v129
    %861 = vmatprep.subr.mxu0 %v145
    %862 = vmatpush1.msra.mxu0 %v144
    %863 = vmatprep.subr.mxu0 %v160
    %864 = vmatpush1.msra.mxu0 %v159
    %865 = vmatprep.subr.mxu0 %v175
    %866 = vmatpush1.msra.mxu0 %v174
    %867 = vmatprep.subr.mxu0 %v190
    %868 = vmatpush1.msra.mxu0 %v189
    %869 = vmatprep.subr.mxu0 %v205
    %870 = vmatpush1.msra.mxu0 %v204
    %871 = vmatprep.subr.mxu0 %v220
    %872 = vmatpush1.msra.mxu0 %v219
    %873 = vmatprep.subr.mxu0 %v235
    %874 = vmatpush1.msra.mxu0 %v234
    %875 = vmatprep.subr.mxu0 %v250
    %876 = vmatpush1.msra.mxu0 %v249
    %877 = vmatprep.subr.mxu0 %v265
    %878 = vmatpush1.msra.mxu0 %v264
    %879 = vmatprep.subr.mxu0 %v280
    %880 = vmatpush1.msra.mxu0 %v279
    %881 = vmatprep.subr.mxu0 %v295
    %882 = vmatpush1.msra.mxu0 %v294
    %883 = vmatprep.subr.mxu0 %v310
    %884 = vmatpush1.msra.mxu0 %v309
    %885 = vmatprep.subr.mxu0 %v325
    %886 = vmatpush1.msra.mxu0 %v324
    %887 = vmatprep.subr.mxu0 %v340
    %888 = vmatpush1.msra.mxu0 %v339
    %889 = vmatprep.subr.mxu0 %v355
    %890 = vmatpush1.msra.mxu0 %v354
    %891 = vmatprep.subr.mxu0 %v370
    %892 = vmatpush1.msra.mxu0 %v369
    %893 = vmatprep.subr.mxu0 %v385
    %894 = vmatpush1.msra.mxu0 %v384
    %895 = vmatprep.subr.mxu0 %v400
    %896 = vmatpush1.msra.mxu0 %v399
    %897 = vmatprep.subr.mxu0 %v415
    %898 = vmatpush1.msra.mxu0 %v414
    %899 = vmatprep.subr.mxu0 %v430
    %900 = vmatpush1.msra.mxu0 %v429
    %901 = vmatprep.subr.mxu0 %v445
    %902 = vmatpush1.msra.mxu0 %v444
    %903 = vmatprep.subr.mxu0 %v460
    %904 = vmatpush1.msra.mxu0 %v459
    %905 = vmatprep.subr.mxu0 %v475
    %906 = vmatpush1.msra.mxu0 %v474
    %907 = vmatprep.subr.mxu0 %v490
    %908 = vmatpush1.msra.mxu0 %v489
    %909 = vmatprep.subr.mxu0 %v505
    %910 = vmatpush1.msra.mxu0 %v504
    %911 = vmatprep.subr.mxu0 %v520
    %912 = vmatpush1.msra.mxu0 %v519
    %913 = vmatprep.subr.mxu0 %v535
    %914 = vmatpush1.msra.mxu0 %v534
    %915 = vmatprep.subr.mxu0 %v550
    %916 = vmatpush1.msra.mxu0 %v549
    %917 = vmatprep.subr.mxu0 %v565
    %918 = vmatpush1.msra.mxu0 %v564
    %919 = vmatprep.mubr.f32.mxu0 %v90
    %920 = vmatmul.mubr.f32.gmra.mrb[0].mxu0 %v89
    %v921 = vpop.f32.mrb[0].mxu0
    %v922 = vadd.f32 0.0, %v921
    %v923 = vpop.f32.mrb[0].mxu0
    %v924 = vadd.f32 0.0, %v923
    %925 = vdwg.mxu0
    %926 = vmatprep.subr.mxu0 %v102
    %927 = vmatpush1.msra.mxu0 %v101
    %928 = vmatprep.subr.mxu0 %v117
    %929 = vmatpush1.msra.mxu0 %v116
    %930 = vmatprep.subr.mxu0 %v132
    %931 = vmatpush1.msra.mxu0 %v131
    %932 = vmatprep.subr.mxu0 %v147
    %933 = vmatpush1.msra.mxu0 %v146
    %934 = vmatprep.subr.mxu0 %v162
    %935 = vmatpush1.msra.mxu0 %v161
    %936 = vmatprep.subr.mxu0 %v177
    %937 = vmatpush1.msra.mxu0 %v176
    %938 = vmatprep.subr.mxu0 %v192
    %939 = vmatpush1.msra.mxu0 %v191
    %940 = vmatprep.subr.mxu0 %v207
    %941 = vmatpush1.msra.mxu0 %v206
    %942 = vmatprep.subr.mxu0 %v222
    %943 = vmatpush1.msra.mxu0 %v221
    %944 = vmatprep.subr.mxu0 %v237
    %945 = vmatpush1.msra.mxu0 %v236
    %946 = vmatprep.subr.mxu0 %v252
    %947 = vmatpush1.msra.mxu0 %v251
    %948 = vmatprep.subr.mxu0 %v267
    %949 = vmatpush1.msra.mxu0 %v266
    %950 = vmatprep.subr.mxu0 %v282
    %951 = vmatpush1.msra.mxu0 %v281
    %952 = vmatprep.subr.mxu0 %v297
    %953 = vmatpush1.msra.mxu0 %v296
    %954 = vmatprep.subr.mxu0 %v312
    %955 = vmatpush1.msra.mxu0 %v311
    %956 = vmatprep.subr.mxu0 %v327
    %957 = vmatpush1.msra.mxu0 %v326
    %958 = vmatprep.subr.mxu0 %v342
    %959 = vmatpush1.msra.mxu0 %v341
    %960 = vmatprep.subr.mxu0 %v357
    %961 = vmatpush1.msra.mxu0 %v356
    %962 = vmatprep.subr.mxu0 %v372
    %963 = vmatpush1.msra.mxu0 %v371
    %964 = vmatprep.subr.mxu0 %v387
    %965 = vmatpush1.msra.mxu0 %v386
    %966 = vmatprep.subr.mxu0 %v402
    %967 = vmatpush1.msra.mxu0 %v401
    %968 = vmatprep.subr.mxu0 %v417
    %969 = vmatpush1.msra.mxu0 %v416
    %970 = vmatprep.subr.mxu0 %v432
    %971 = vmatpush1.msra.mxu0 %v431
    %972 = vmatprep.subr.mxu0 %v447
    %973 = vmatpush1.msra.mxu0 %v446
    %974 = vmatprep.subr.mxu0 %v462
    %975 = vmatpush1.msra.mxu0 %v461
    %976 = vmatprep.subr.mxu0 %v477
    %977 = vmatpush1.msra.mxu0 %v476
    %978 = vmatprep.subr.mxu0 %v492
    %979 = vmatpush1.msra.mxu0 %v491
    %980 = vmatprep.subr.mxu0 %v507
    %981 = vmatpush1.msra.mxu0 %v506
    %982 = vmatprep.subr.mxu0 %v522
    %983 = vmatpush1.msra.mxu0 %v521
    %984 = vmatprep.subr.mxu0 %v537
    %985 = vmatpush1.msra.mxu0 %v536
    %986 = vmatprep.subr.mxu0 %v552
    %987 = vmatpush1.msra.mxu0 %v551
    %988 = vmatprep.subr.mxu0 %v567
    %989 = vmatpush1.msra.mxu0 %v566
    %990 = vmatprep.mubr.f32.mxu0 %v90
    %991 = vmatmul.mubr.f32.gmra.mrb[0].mxu0 %v89
    %v992 = vpop.f32.mrb[0].mxu0
    %v993 = vadd.f32 0.0, %v992
    %v994 = vpop.f32.mrb[0].mxu0
    %v995 = vadd.f32 0.0, %v994
    %996 = vdwg.mxu0
    %997 = vmatprep.subr.mxu0 %v104
    %998 = vmatpush1.msra.mxu0 %v103
    %999 = vmatprep.subr.mxu0 %v119
    %1000 = vmatpush1.msra.mxu0 %v118
    %1001 = vmatprep.subr.mxu0 %v134
    %1002 = vmatpush1.msra.mxu0 %v133
    %1003 = vmatprep.subr.mxu0 %v149
    %1004 = vmatpush1.msra.mxu0 %v148
    %1005 = vmatprep.subr.mxu0 %v164
    %1006 = vmatpush1.msra.mxu0 %v163
    %1007 = vmatprep.subr.mxu0 %v179
    %1008 = vmatpush1.msra.mxu0 %v178
    %1009 = vmatprep.subr.mxu0 %v194
    %1010 = vmatpush1.msra.mxu0 %v193
    %1011 = vmatprep.subr.mxu0 %v209
    %1012 = vmatpush1.msra.mxu0 %v208
    %1013 = vmatprep.subr.mxu0 %v224
    %1014 = vmatpush1.msra.mxu0 %v223
    %1015 = vmatprep.subr.mxu0 %v239
    %1016 = vmatpush1.msra.mxu0 %v238
    %1017 = vmatprep.subr.mxu0 %v254
    %1018 = vmatpush1.msra.mxu0 %v253
    %1019 = vmatprep.subr.mxu0 %v269
    %1020 = vmatpush1.msra.mxu0 %v268
    %1021 = vmatprep.subr.mxu0 %v284
    %1022 = vmatpush1.msra.mxu0 %v283
    %1023 = vmatprep.subr.mxu0 %v299
    %1024 = vmatpush1.msra.mxu0 %v298
    %1025 = vmatprep.subr.mxu0 %v314
    %1026 = vmatpush1.msra.mxu0 %v313
    %1027 = vmatprep.subr.mxu0 %v329
    %1028 = vmatpush1.msra.mxu0 %v328
    %1029 = vmatprep.subr.mxu0 %v344
    %1030 = vmatpush1.msra.mxu0 %v343
    %1031 = vmatprep.subr.mxu0 %v359
    %1032 = vmatpush1.msra.mxu0 %v358
    %1033 = vmatprep.subr.mxu0 %v374
    %1034 = vmatpush1.msra.mxu0 %v373
    %1035 = vmatprep.subr.mxu0 %v389
    %1036 = vmatpush1.msra.mxu0 %v388
    %1037 = vmatprep.subr.mxu0 %v404
    %1038 = vmatpush1.msra.mxu0 %v403
    %1039 = vmatprep.subr.mxu0 %v419
    %1040 = vmatpush1.msra.mxu0 %v418
    %1041 = vmatprep.subr.mxu0 %v434
    %1042 = vmatpush1.msra.mxu0 %v433
    %1043 = vmatprep.subr.mxu0 %v449
    %1044 = vmatpush1.msra.mxu0 %v448
    %1045 = vmatprep.subr.mxu0 %v464
    %1046 = vmatpush1.msra.mxu0 %v463
    %1047 = vmatprep.subr.mxu0 %v479
    %1048 = vmatpush1.msra.mxu0 %v478
    %1049 = vmatprep.subr.mxu0 %v494
    %1050 = vmatpush1.msra.mxu0 %v493
    %1051 = vmatprep.subr.mxu0 %v509
    %1052 = vmatpush1.msra.mxu0 %v508
    %1053 = vmatprep.subr.mxu0 %v524
    %1054 = vmatpush1.msra.mxu0 %v523
    %1055 = vmatprep.subr.mxu0 %v539
    %1056 = vmatpush1.msra.mxu0 %v538
    %1057 = vmatprep.subr.mxu0 %v554
    %1058 = vmatpush1.msra.mxu0 %v553
    %1059 = vmatprep.subr.mxu0 %v569
    %1060 = vmatpush1.msra.mxu0 %v568
    %1061 = vmatprep.mubr.f32.mxu0 %v90
    %1062 = vmatmul.mubr.f32.gmra.mrb[0].mxu0 %v89
    %v1063 = vpop.f32.mrb[0].mxu0
    %v1064 = vadd.f32 0.0, %v1063
    %v1065 = vpop.f32.mrb[0].mxu0
    %v1066 = vadd.f32 0.0, %v1065
    %1067 = vdwg.mxu0
    %1068 = vmatprep.subr.mxu0 0.0
    %1069 = vmatpush1.msra.mxu0 %v105
    %1070 = vmatprep.subr.mxu0 0.0
    %1071 = vmatpush1.msra.mxu0 %v120
    %1072 = vmatprep.subr.mxu0 0.0
    %1073 = vmatpush1.msra.mxu0 %v135
    %1074 = vmatprep.subr.mxu0 0.0
    %1075 = vmatpush1.msra.mxu0 %v150
    %1076 = vmatprep.subr.mxu0 0.0
    %1077 = vmatpush1.msra.mxu0 %v165
    %1078 = vmatprep.subr.mxu0 0.0
    %1079 = vmatpush1.msra.mxu0 %v180
    %1080 = vmatprep.subr.mxu0 0.0
    %1081 = vmatpush1.msra.mxu0 %v195
    %1082 = vmatprep.subr.mxu0 0.0
    %1083 = vmatpush1.msra.mxu0 %v210
    %1084 = vmatprep.subr.mxu0 0.0
    %1085 = vmatpush1.msra.mxu0 %v225
    %1086 = vmatprep.subr.mxu0 0.0
    %1087 = vmatpush1.msra.mxu0 %v240
    %1088 = vmatprep.subr.mxu0 0.0
    %1089 = vmatpush1.msra.mxu0 %v255
    %1090 = vmatprep.subr.mxu0 0.0
    %1091 = vmatpush1.msra.mxu0 %v270
    %1092 = vmatprep.subr.mxu0 0.0
    %1093 = vmatpush1.msra.mxu0 %v285
    %1094 = vmatprep.subr.mxu0 0.0
    %1095 = vmatpush1.msra.mxu0 %v300
    %1096 = vmatprep.subr.mxu0 0.0
    %1097 = vmatpush1.msra.mxu0 %v315
    %1098 = vmatprep.subr.mxu0 0.0
    %1099 = vmatpush1.msra.mxu0 %v330
    %1100 = vmatprep.subr.mxu0 0.0
    %1101 = vmatpush1.msra.mxu0 %v345
    %1102 = vmatprep.subr.mxu0 0.0
    %1103 = vmatpush1.msra.mxu0 %v360
    %1104 = vmatprep.subr.mxu0 0.0
    %1105 = vmatpush1.msra.mxu0 %v375
    %1106 = vmatprep.subr.mxu0 0.0
    %1107 = vmatpush1.msra.mxu0 %v390
    %1108 = vmatprep.subr.mxu0 0.0
    %1109 = vmatpush1.msra.mxu0 %v405
    %1110 = vmatprep.subr.mxu0 0.0
    %1111 = vmatpush1.msra.mxu0 %v420
    %1112 = vmatprep.subr.mxu0 0.0
    %1113 = vmatpush1.msra.mxu0 %v435
    %1114 = vmatprep.subr.mxu0 0.0
    %1115 = vmatpush1.msra.mxu0 %v450
    %1116 = vmatprep.subr.mxu0 0.0
    %1117 = vmatpush1.msra.mxu0 %v465
    %1118 = vmatprep.subr.mxu0 0.0
    %1119 = vmatpush1.msra.mxu0 %v480
    %1120 = vmatprep.subr.mxu0 0.0
    %1121 = vmatpush1.msra.mxu0 %v495
    %1122 = vmatprep.subr.mxu0 0.0
    %1123 = vmatpush1.msra.mxu0 %v510
    %1124 = vmatprep.subr.mxu0 0.0
    %1125 = vmatpush1.msra.mxu0 %v525
    %1126 = vmatprep.subr.mxu0 0.0
    %1127 = vmatpush1.msra.mxu0 %v540
    %1128 = vmatprep.subr.mxu0 0.0
    %1129 = vmatpush1.msra.mxu0 %v555
    %1130 = vmatprep.subr.mxu0 0.0
    %1131 = vmatpush1.msra.mxu0 %v570
    %1132 = vmatprep.mubr.f32.mxu0 %v90
    %1133 = vmatmul.mubr.f32.gmra.mrb[0].mxu0 %v89
    %v1134 = vpop.f32.mrb[0].mxu0
    %v1135 = vadd.f32 0.0, %v1134
    %v1136 = vpop.f32.mrb[0].mxu0
    %1137 = vdwg.mxu0
    %v1138 = vmul.f32 %v782, %v638
    %v1139 = vmul.f32 %v851, %v640
    %v1140 = vmul.f32 %v853, %v709
    %v1141 = vmul.f32 %v922, %v711
    %v1142 = vmul.f32 %v924, %v780
    %v1143 = vld [vmem:[#allocation4] sm:$0xff]
    %v1144 = vld [vmem:[#allocation4 + $0x8] sm:$0xff]
    %v1145 = vld [vmem:[#allocation4 + $0x10] sm:$0xff]
    %v1146 = vld [vmem:[#allocation4 + $0x18] sm:$0xff]
    %v1147 = vld [vmem:[#allocation4 + $0x20] sm:$0xff]
    %v1148 = vld [vmem:[#allocation4 + $0x28] sm:$0xff]
    %v1149 = vld [vmem:[#allocation4 + $0x30] sm:$0xff]
    %v1150 = vld [vmem:[#allocation4 + $0x38] sm:$0xff]
    %v1151 = vld [vmem:[#allocation4 + $0x40] sm:$0xff]
    %v1152 = vld [vmem:[#allocation4 + $0x48] sm:$0xff]
    %v1153 = vld [vmem:[#allocation4 + $0x50] sm:$0xff]
    %v1154 = vld [vmem:[#allocation4 + $0x58] sm:$0xff]
    %v1155 = vld [vmem:[#allocation4 + $0x60] sm:$0xff]
    %v1156 = vld [vmem:[#allocation4 + $0x68] sm:$0xff]
    %v1157 = vld [vmem:[#allocation4 + $0x70] sm:$0xff]
    %v1158 = vld [vmem:[#allocation4 + $0x78] sm:$0xff]
    %v1159 = vld [vmem:[#allocation4 + $0x80] sm:$0xff]
    %v1160 = vld [vmem:[#allocation4 + $0x88] sm:$0xff]
    %v1161 = vld [vmem:[#allocation4 + $0x90] sm:$0xff]
    %v1162 = vld [vmem:[#allocation4 + $0x98] sm:$0xff]
    %v1163 = vld [vmem:[#allocation4 + $0xa0] sm:$0xff]
    %v1164 = vld [vmem:[#allocation4 + $0xa8] sm:$0xff]
    %v1165 = vld [vmem:[#allocation4 + $0xb0] sm:$0xff]
    %v1166 = vld [vmem:[#allocation4 + $0xb8] sm:$0xff]
    %v1167 = vld [vmem:[#allocation4 + $0xc0] sm:$0xff]
    %v1168 = vld [vmem:[#allocation4 + $0xc8] sm:$0xff]
    %v1169 = vld [vmem:[#allocation4 + $0xd0] sm:$0xff]
    %v1170 = vld [vmem:[#allocation4 + $0xd8] sm:$0xff]
    %v1171 = vld [vmem:[#allocation4 + $0xe0] sm:$0xff]
    %v1172 = vld [vmem:[#allocation4 + $0xe8] sm:$0xff]
    %v1173 = vld [vmem:[#allocation4 + $0xf0] sm:$0xff]
    %v1174 = vld [vmem:[#allocation4 + $0xf8] sm:$0xff]
    %v1175 = vld [vmem:[#allocation4 + $0x100] sm:$0xff]
    %v1176 = vld [vmem:[#allocation4 + $0x108] sm:$0xff]
    %v1177 = vld [vmem:[#allocation4 + $0x110] sm:$0xff]
    %v1178 = vld [vmem:[#allocation4 + $0x118] sm:$0xff]
    %v1179 = vld [vmem:[#allocation4 + $0x120] sm:$0xff]
    %v1180 = vld [vmem:[#allocation4 + $0x128] sm:$0xff]
    %v1181 = vld [vmem:[#allocation4 + $0x130] sm:$0xff]
    %v1182 = vld [vmem:[#allocation4 + $0x138] sm:$0xff]
    %v1183 = vld [vmem:[#allocation4 + $0x140] sm:$0xff]
    %v1184 = vld [vmem:[#allocation4 + $0x148] sm:$0xff]
    %v1185 = vld [vmem:[#allocation4 + $0x150] sm:$0xff]
    %v1186 = vld [vmem:[#allocation4 + $0x158] sm:$0xff]
    %v1187 = vld [vmem:[#allocation4 + $0x160] sm:$0xff]
    %v1188 = vld [vmem:[#allocation4 + $0x168] sm:$0xff]
    %v1189 = vld [vmem:[#allocation4 + $0x170] sm:$0xff]
    %v1190 = vld [vmem:[#allocation4 + $0x178] sm:$0xff]
    %v1191 = vld [vmem:[#allocation4 + $0x180] sm:$0xff]
    %v1192 = vld [vmem:[#allocation4 + $0x188] sm:$0xff]
    %v1193 = vld [vmem:[#allocation4 + $0x190] sm:$0xff]
    %v1194 = vld [vmem:[#allocation4 + $0x198] sm:$0xff]
    %v1195 = vld [vmem:[#allocation4 + $0x1a0] sm:$0xff]
    %v1196 = vld [vmem:[#allocation4 + $0x1a8] sm:$0xff]
    %v1197 = vld [vmem:[#allocation4 + $0x1b0] sm:$0xff]
    %v1198 = vld [vmem:[#allocation4 + $0x1b8] sm:$0xff]
    %v1199 = vld [vmem:[#allocation4 + $0x1c0] sm:$0xff]
    %v1200 = vld [vmem:[#allocation4 + $0x1c8] sm:$0xff]
    %v1201 = vld [vmem:[#allocation4 + $0x1d0] sm:$0xff]
    %v1202 = vld [vmem:[#allocation4 + $0x1d8] sm:$0xff]
    %v1203 = vld [vmem:[#allocation4 + $0x1e0] sm:$0xff]
    %v1204 = vld [vmem:[#allocation4 + $0x1e8] sm:$0xff]
    %v1205 = vld [vmem:[#allocation4 + $0x1f0] sm:$0xff]
    %v1206 = vld [vmem:[#allocation4 + $0x1f8] sm:$0xff]
    %v1207 = vld [vmem:[#allocation4 + $0x200] sm:$0xff]
    %v1208 = vld [vmem:[#allocation4 + $0x208] sm:$0xff]
    %v1209 = vld [vmem:[#allocation4 + $0x210] sm:$0xff]
    %v1210 = vld [vmem:[#allocation4 + $0x218] sm:$0xff]
    %v1211 = vld [vmem:[#allocation4 + $0x220] sm:$0xff]
    %v1212 = vld [vmem:[#allocation4 + $0x228] sm:$0xff]
    %v1213 = vld [vmem:[#allocation4 + $0x230] sm:$0xff]
    %v1214 = vld [vmem:[#allocation4 + $0x238] sm:$0xff]
    %v1215 = vld [vmem:[#allocation4 + $0x240] sm:$0xff]
    %v1216 = vld [vmem:[#allocation4 + $0x248] sm:$0xff]
    %v1217 = vld [vmem:[#allocation4 + $0x250] sm:$0xff]
    %v1218 = vld [vmem:[#allocation4 + $0x258] sm:$0xff]
    %v1219 = vld [vmem:[#allocation4 + $0x260] sm:$0xff]
    %v1220 = vld [vmem:[#allocation4 + $0x268] sm:$0xff]
    %v1221 = vld [vmem:[#allocation4 + $0x270] sm:$0xff]
    %v1222 = vld [vmem:[#allocation4 + $0x278] sm:$0xff]
    %v1223 = vld [vmem:[#allocation4 + $0x280] sm:$0xff]
    %v1224 = vld [vmem:[#allocation4 + $0x288] sm:$0xff]
    %v1225 = vld [vmem:[#allocation4 + $0x290] sm:$0xff]
    %v1226 = vld [vmem:[#allocation4 + $0x298] sm:$0xff]
    %v1227 = vld [vmem:[#allocation4 + $0x2a0] sm:$0xff]
    %v1228 = vld [vmem:[#allocation4 + $0x2a8] sm:$0xff]
    %v1229 = vld [vmem:[#allocation4 + $0x2b0] sm:$0xff]
    %v1230 = vld [vmem:[#allocation4 + $0x2b8] sm:$0xff]
    %v1231 = vld [vmem:[#allocation4 + $0x2c0] sm:$0xff]
    %v1232 = vld [vmem:[#allocation4 + $0x2c8] sm:$0xff]
    %v1233 = vld [vmem:[#allocation4 + $0x2d0] sm:$0xff]
    %v1234 = vld [vmem:[#allocation4 + $0x2d8] sm:$0xff]
    %v1235 = vld [vmem:[#allocation4 + $0x2e0] sm:$0xff]
    %v1236 = vld [vmem:[#allocation4 + $0x2e8] sm:$0xff]
    %v1237 = vld [vmem:[#allocation4 + $0x2f0] sm:$0xff]
    %v1238 = vld [vmem:[#allocation4 + $0x2f8] sm:$0xff]
    %v1239 = vld [vmem:[#allocation4 + $0x300] sm:$0xff]
    %v1240 = vld [vmem:[#allocation4 + $0x308] sm:$0xff]
    %v1241 = vld [vmem:[#allocation4 + $0x310] sm:$0xff]
    %v1242 = vld [vmem:[#allocation4 + $0x318] sm:$0xff]
    %v1243 = vld [vmem:[#allocation4 + $0x320] sm:$0xff]
    %v1244 = vld [vmem:[#allocation4 + $0x328] sm:$0xff]
    %v1245 = vld [vmem:[#allocation4 + $0x330] sm:$0xff]
    %v1246 = vld [vmem:[#allocation4 + $0x338] sm:$0xff]
    %v1247 = vld [vmem:[#allocation4 + $0x340] sm:$0xff]
    %v1248 = vld [vmem:[#allocation4 + $0x348] sm:$0xff]
    %v1249 = vld [vmem:[#allocation4 + $0x350] sm:$0xff]
    %v1250 = vld [vmem:[#allocation4 + $0x358] sm:$0xff]
    %v1251 = vld [vmem:[#allocation4 + $0x360] sm:$0xff]
    %v1252 = vld [vmem:[#allocation4 + $0x368] sm:$0xff]
    %v1253 = vld [vmem:[#allocation4 + $0x370] sm:$0xff]
    %v1254 = vld [vmem:[#allocation4 + $0x378] sm:$0xff]
    %v1255 = vld [vmem:[#allocation4 + $0x380] sm:$0xff]
    %v1256 = vld [vmem:[#allocation4 + $0x388] sm:$0xff]
    %v1257 = vld [vmem:[#allocation4 + $0x390] sm:$0xff]
    %v1258 = vld [vmem:[#allocation4 + $0x398] sm:$0xff]
    %v1259 = vld [vmem:[#allocation4 + $0x3a0] sm:$0xff]
    %v1260 = vld [vmem:[#allocation4 + $0x3a8] sm:$0xff]
    %v1261 = vld [vmem:[#allocation4 + $0x3b0] sm:$0xff]
    %v1262 = vld [vmem:[#allocation4 + $0x3b8] sm:$0xff]
    %v1263 = vld [vmem:[#allocation4 + $0x3c0] sm:$0xff]
    %v1264 = vld [vmem:[#allocation4 + $0x3c8] sm:$0xff]
    %v1265 = vld [vmem:[#allocation4 + $0x3d0] sm:$0xff]
    %v1266 = vld [vmem:[#allocation4 + $0x3d8] sm:$0xff]
    %v1267 = vld [vmem:[#allocation4 + $0x3e0] sm:$0xff]
    %v1268 = vld [vmem:[#allocation4 + $0x3e8] sm:$0xff]
    %v1269 = vld [vmem:[#allocation4 + $0x3f0] sm:$0xff]
    %v1270 = vld [vmem:[#allocation4 + $0x3f8] sm:$0xff]
    %v1271 = vld [vmem:[#allocation4 + $0x400] sm:$0xff]
    %v1272 = vld [vmem:[#allocation4 + $0x408] sm:$0xff]
    %v1273 = vld [vmem:[#allocation4 + $0x410] sm:$0xff]
    %v1274 = vld [vmem:[#allocation4 + $0x418] sm:$0xff]
    %v1275 = vld [vmem:[#allocation4 + $0x420] sm:$0xff]
    %v1276 = vld [vmem:[#allocation4 + $0x428] sm:$0xff]
    %v1277 = vld [vmem:[#allocation4 + $0x430] sm:$0xff]
    %v1278 = vld [vmem:[#allocation4 + $0x438] sm:$0xff]
    %v1279 = vld [vmem:[#allocation4 + $0x440] sm:$0xff]
    %v1280 = vld [vmem:[#allocation4 + $0x448] sm:$0xff]
    %v1281 = vld [vmem:[#allocation4 + $0x450] sm:$0xff]
    %v1282 = vld [vmem:[#allocation4 + $0x458] sm:$0xff]
    %v1283 = vld [vmem:[#allocation4 + $0x460] sm:$0xff]
    %v1284 = vld [vmem:[#allocation4 + $0x468] sm:$0xff]
    %v1285 = vld [vmem:[#allocation4 + $0x470] sm:$0xff]
    %v1286 = vld [vmem:[#allocation4 + $0x478] sm:$0xff]
    %v1287 = vld [vmem:[#allocation4 + $0x480] sm:$0xff]
    %v1288 = vld [vmem:[#allocation4 + $0x488] sm:$0xff]
    %v1289 = vld [vmem:[#allocation4 + $0x490] sm:$0xff]
    %v1290 = vld [vmem:[#allocation4 + $0x498] sm:$0xff]
    %v1291 = vld [vmem:[#allocation4 + $0x4a0] sm:$0xff]
    %v1292 = vld [vmem:[#allocation4 + $0x4a8] sm:$0xff]
    %v1293 = vld [vmem:[#allocation4 + $0x4b0] sm:$0xff]
    %v1294 = vld [vmem:[#allocation4 + $0x4b8] sm:$0xff]
    %v1295 = vld [vmem:[#allocation4 + $0x4c0] sm:$0xff]
    %v1296 = vld [vmem:[#allocation4 + $0x4c8] sm:$0xff]
    %v1297 = vld [vmem:[#allocation4 + $0x4d0] sm:$0xff]
    %v1298 = vld [vmem:[#allocation4 + $0x4d8] sm:$0xff]
    %v1299 = vld [vmem:[#allocation4 + $0x4e0] sm:$0xff]
    %v1300 = vld [vmem:[#allocation4 + $0x4e8] sm:$0xff]
    %v1301 = vld [vmem:[#allocation4 + $0x4f0] sm:$0xff]
    %v1302 = vld [vmem:[#allocation4 + $0x4f8] sm:$0xff]
    %v1303 = vmul.f32 %v993, %v638
    %v1304 = vmul.f32 %v995, %v640
    %v1305 = vmul.f32 %v1064, %v709
    %v1306 = vmul.f32 %v1066, %v711
    %v1307 = vmul.f32 %v1135, %v780
    %v1308 = vld [vmem:[#allocation6] sm:$0xff]
    %v1309 = vld [vmem:[#allocation6 + $0x8] sm:$0xff]
    %v1310 = vld [vmem:[#allocation6 + $0x10] sm:$0xff]
    %v1311 = vld [vmem:[#allocation6 + $0x18] sm:$0xff]
    %v1312 = vld [vmem:[#allocation6 + $0x20] sm:$0xff]
    %v1313 = vld [vmem:[#allocation6 + $0x28] sm:$0xff]
    %v1314 = vld [vmem:[#allocation6 + $0x30] sm:$0xff]
    %v1315 = vld [vmem:[#allocation6 + $0x38] sm:$0xff]
    %v1316 = vld [vmem:[#allocation6 + $0x40] sm:$0xff]
    %v1317 = vld [vmem:[#allocation6 + $0x48] sm:$0xff]
    %v1318 = vld [vmem:[#allocation6 + $0x50] sm:$0xff]
    %v1319 = vld [vmem:[#allocation6 + $0x58] sm:$0xff]
    %v1320 = vld [vmem:[#allocation6 + $0x60] sm:$0xff]
    %v1321 = vld [vmem:[#allocation6 + $0x68] sm:$0xff]
    %v1322 = vld [vmem:[#allocation6 + $0x70] sm:$0xff]
    %v1323 = vld [vmem:[#allocation6 + $0x78] sm:$0xff]
    %v1324 = vld [vmem:[#allocation6 + $0x80] sm:$0xff]
    %v1325 = vld [vmem:[#allocation6 + $0x88] sm:$0xff]
    %v1326 = vld [vmem:[#allocation6 + $0x90] sm:$0xff]
    %v1327 = vld [vmem:[#allocation6 + $0x98] sm:$0xff]
    %v1328 = vld [vmem:[#allocation6 + $0xa0] sm:$0xff]
    %v1329 = vld [vmem:[#allocation6 + $0xa8] sm:$0xff]
    %v1330 = vld [vmem:[#allocation6 + $0xb0] sm:$0xff]
    %v1331 = vld [vmem:[#allocation6 + $0xb8] sm:$0xff]
    %v1332 = vld [vmem:[#allocation6 + $0xc0] sm:$0xff]
    %v1333 = vld [vmem:[#allocation6 + $0xc8] sm:$0xff]
    %v1334 = vld [vmem:[#allocation6 + $0xd0] sm:$0xff]
    %v1335 = vld [vmem:[#allocation6 + $0xd8] sm:$0xff]
    %v1336 = vld [vmem:[#allocation6 + $0xe0] sm:$0xff]
    %v1337 = vld [vmem:[#allocation6 + $0xe8] sm:$0xff]
    %v1338 = vld [vmem:[#allocation6 + $0xf0] sm:$0xff]
    %v1339 = vld [vmem:[#allocation6 + $0xf8] sm:$0xff]
    %v1340 = vld [vmem:[#allocation6 + $0x100] sm:$0xff]
    %v1341 = vld [vmem:[#allocation6 + $0x108] sm:$0xff]
    %v1342 = vld [vmem:[#allocation6 + $0x110] sm:$0xff]
    %v1343 = vld [vmem:[#allocation6 + $0x118] sm:$0xff]
    %v1344 = vld [vmem:[#allocation6 + $0x120] sm:$0xff]
    %v1345 = vld [vmem:[#allocation6 + $0x128] sm:$0xff]
    %v1346 = vld [vmem:[#allocation6 + $0x130] sm:$0xff]
    %v1347 = vld [vmem:[#allocation6 + $0x138] sm:$0xff]
    %v1348 = vld [vmem:[#allocation6 + $0x140] sm:$0xff]
    %v1349 = vld [vmem:[#allocation6 + $0x148] sm:$0xff]
    %v1350 = vld [vmem:[#allocation6 + $0x150] sm:$0xff]
    %v1351 = vld [vmem:[#allocation6 + $0x158] sm:$0xff]
    %v1352 = vld [vmem:[#allocation6 + $0x160] sm:$0xff]
    %v1353 = vld [vmem:[#allocation6 + $0x168] sm:$0xff]
    %v1354 = vld [vmem:[#allocation6 + $0x170] sm:$0xff]
    %v1355 = vld [vmem:[#allocation6 + $0x178] sm:$0xff]
    %v1356 = vld [vmem:[#allocation6 + $0x180] sm:$0xff]
    %v1357 = vld [vmem:[#allocation6 + $0x188] sm:$0xff]
    %v1358 = vld [vmem:[#allocation6 + $0x190] sm:$0xff]
    %v1359 = vld [vmem:[#allocation6 + $0x198] sm:$0xff]
    %v1360 = vld [vmem:[#allocation6 + $0x1a0] sm:$0xff]
    %v1361 = vld [vmem:[#allocation6 + $0x1a8] sm:$0xff]
    %v1362 = vld [vmem:[#allocation6 + $0x1b0] sm:$0xff]
    %v1363 = vld [vmem:[#allocation6 + $0x1b8] sm:$0xff]
    %v1364 = vld [vmem:[#allocation6 + $0x1c0] sm:$0xff]
    %v1365 = vld [vmem:[#allocation6 + $0x1c8] sm:$0xff]
    %v1366 = vld [vmem:[#allocation6 + $0x1d0] sm:$0xff]
    %v1367 = vld [vmem:[#allocation6 + $0x1d8] sm:$0xff]
    %v1368 = vld [vmem:[#allocation6 + $0x1e0] sm:$0xff]
    %v1369 = vld [vmem:[#allocation6 + $0x1e8] sm:$0xff]
    %v1370 = vld [vmem:[#allocation6 + $0x1f0] sm:$0xff]
    %v1371 = vld [vmem:[#allocation6 + $0x1f8] sm:$0xff]
    %v1372 = vld [vmem:[#allocation6 + $0x200] sm:$0xff]
    %v1373 = vld [vmem:[#allocation6 + $0x208] sm:$0xff]
    %v1374 = vld [vmem:[#allocation6 + $0x210] sm:$0xff]
    %v1375 = vld [vmem:[#allocation6 + $0x218] sm:$0xff]
    %v1376 = vld [vmem:[#allocation6 + $0x220] sm:$0xff]
    %v1377 = vld [vmem:[#allocation6 + $0x228] sm:$0xff]
    %v1378 = vld [vmem:[#allocation6 + $0x230] sm:$0xff]
    %v1379 = vld [vmem:[#allocation6 + $0x238] sm:$0xff]
    %v1380 = vld [vmem:[#allocation6 + $0x240] sm:$0xff]
    %v1381 = vld [vmem:[#allocation6 + $0x248] sm:$0xff]
    %v1382 = vld [vmem:[#allocation6 + $0x250] sm:$0xff]
    %v1383 = vld [vmem:[#allocation6 + $0x258] sm:$0xff]
    %v1384 = vld [vmem:[#allocation6 + $0x260] sm:$0xff]
    %v1385 = vld [vmem:[#allocation6 + $0x268] sm:$0xff]
    %v1386 = vld [vmem:[#allocation6 + $0x270] sm:$0xff]
    %v1387 = vld [vmem:[#allocation6 + $0x278] sm:$0xff]
    %v1388 = vld [vmem:[#allocation6 + $0x280] sm:$0xff]
    %v1389 = vld [vmem:[#allocation6 + $0x288] sm:$0xff]
    %v1390 = vld [vmem:[#allocation6 + $0x290] sm:$0xff]
    %v1391 = vld [vmem:[#allocation6 + $0x298] sm:$0xff]
    %v1392 = vld [vmem:[#allocation6 + $0x2a0] sm:$0xff]
    %v1393 = vld [vmem:[#allocation6 + $0x2a8] sm:$0xff]
    %v1394 = vld [vmem:[#allocation6 + $0x2b0] sm:$0xff]
    %v1395 = vld [vmem:[#allocation6 + $0x2b8] sm:$0xff]
    %v1396 = vld [vmem:[#allocation6 + $0x2c0] sm:$0xff]
    %v1397 = vld [vmem:[#allocation6 + $0x2c8] sm:$0xff]
    %v1398 = vld [vmem:[#allocation6 + $0x2d0] sm:$0xff]
    %v1399 = vld [vmem:[#allocation6 + $0x2d8] sm:$0xff]
    %v1400 = vld [vmem:[#allocation6 + $0x2e0] sm:$0xff]
    %v1401 = vld [vmem:[#allocation6 + $0x2e8] sm:$0xff]
    %v1402 = vld [vmem:[#allocation6 + $0x2f0] sm:$0xff]
    %v1403 = vld [vmem:[#allocation6 + $0x2f8] sm:$0xff]
    %v1404 = vld [vmem:[#allocation6 + $0x300] sm:$0xff]
    %v1405 = vld [vmem:[#allocation6 + $0x308] sm:$0xff]
    %v1406 = vld [vmem:[#allocation6 + $0x310] sm:$0xff]
    %v1407 = vld [vmem:[#allocation6 + $0x318] sm:$0xff]
    %v1408 = vld [vmem:[#allocation6 + $0x320] sm:$0xff]
    %v1409 = vld [vmem:[#allocation6 + $0x328] sm:$0xff]
    %v1410 = vld [vmem:[#allocation6 + $0x330] sm:$0xff]
    %v1411 = vld [vmem:[#allocation6 + $0x338] sm:$0xff]
    %v1412 = vld [vmem:[#allocation6 + $0x340] sm:$0xff]
    %v1413 = vld [vmem:[#allocation6 + $0x348] sm:$0xff]
    %v1414 = vld [vmem:[#allocation6 + $0x350] sm:$0xff]
    %v1415 = vld [vmem:[#allocation6 + $0x358] sm:$0xff]
    %v1416 = vld [vmem:[#allocation6 + $0x360] sm:$0xff]
    %v1417 = vld [vmem:[#allocation6 + $0x368] sm:$0xff]
    %v1418 = vld [vmem:[#allocation6 + $0x370] sm:$0xff]
    %v1419 = vld [vmem:[#allocation6 + $0x378] sm:$0xff]
    %v1420 = vld [vmem:[#allocation6 + $0x380] sm:$0xff]
    %v1421 = vld [vmem:[#allocation6 + $0x388] sm:$0xff]
    %v1422 = vld [vmem:[#allocation6 + $0x390] sm:$0xff]
    %v1423 = vld [vmem:[#allocation6 + $0x398] sm:$0xff]
    %v1424 = vld [vmem:[#allocation6 + $0x3a0] sm:$0xff]
    %v1425 = vld [vmem:[#allocation6 + $0x3a8] sm:$0xff]
    %v1426 = vld [vmem:[#allocation6 + $0x3b0] sm:$0xff]
    %v1427 = vld [vmem:[#allocation6 + $0x3b8] sm:$0xff]
    %v1428 = vld [vmem:[#allocation6 + $0x3c0] sm:$0xff]
    %v1429 = vld [vmem:[#allocation6 + $0x3c8] sm:$0xff]
    %v1430 = vld [vmem:[#allocation6 + $0x3d0] sm:$0xff]
    %v1431 = vld [vmem:[#allocation6 + $0x3d8] sm:$0xff]
    %v1432 = vld [vmem:[#allocation6 + $0x3e0] sm:$0xff]
    %v1433 = vld [vmem:[#allocation6 + $0x3e8] sm:$0xff]
    %v1434 = vld [vmem:[#allocation6 + $0x3f0] sm:$0xff]
    %v1435 = vld [vmem:[#allocation6 + $0x3f8] sm:$0xff]
    %v1436 = vld [vmem:[#allocation6 + $0x400] sm:$0xff]
    %v1437 = vld [vmem:[#allocation6 + $0x408] sm:$0xff]
    %v1438 = vld [vmem:[#allocation6 + $0x410] sm:$0xff]
    %v1439 = vld [vmem:[#allocation6 + $0x418] sm:$0xff]
    %v1440 = vld [vmem:[#allocation6 + $0x420] sm:$0xff]
    %v1441 = vld [vmem:[#allocation6 + $0x428] sm:$0xff]
    %v1442 = vld [vmem:[#allocation6 + $0x430] sm:$0xff]
    %v1443 = vld [vmem:[#allocation6 + $0x438] sm:$0xff]
    %v1444 = vld [vmem:[#allocation6 + $0x440] sm:$0xff]
    %v1445 = vld [vmem:[#allocation6 + $0x448] sm:$0xff]
    %v1446 = vld [vmem:[#allocation6 + $0x450] sm:$0xff]
    %v1447 = vld [vmem:[#allocation6 + $0x458] sm:$0xff]
    %v1448 = vld [vmem:[#allocation6 + $0x460] sm:$0xff]
    %v1449 = vld [vmem:[#allocation6 + $0x468] sm:$0xff]
    %v1450 = vld [vmem:[#allocation6 + $0x470] sm:$0xff]
    %v1451 = vld [vmem:[#allocation6 + $0x478] sm:$0xff]
    %v1452 = vld [vmem:[#allocation6 + $0x480] sm:$0xff]
    %v1453 = vld [vmem:[#allocation6 + $0x488] sm:$0xff]
    %v1454 = vld [vmem:[#allocation6 + $0x490] sm:$0xff]
    %v1455 = vld [vmem:[#allocation6 + $0x498] sm:$0xff]
    %v1456 = vld [vmem:[#allocation6 + $0x4a0] sm:$0xff]
    %v1457 = vld [vmem:[#allocation6 + $0x4a8] sm:$0xff]
    %v1458 = vld [vmem:[#allocation6 + $0x4b0] sm:$0xff]
    %v1459 = vld [vmem:[#allocation6 + $0x4b8] sm:$0xff]
    %v1460 = vld [vmem:[#allocation6 + $0x4c0] sm:$0xff]
    %v1461 = vld [vmem:[#allocation6 + $0x4c8] sm:$0xff]
    %v1462 = vld [vmem:[#allocation6 + $0x4d0] sm:$0xff]
    %v1463 = vld [vmem:[#allocation6 + $0x4d8] sm:$0xff]
    %v1464 = vld [vmem:[#allocation6 + $0x4e0] sm:$0xff]
    %v1465 = vld [vmem:[#allocation6 + $0x4e8] sm:$0xff]
    %v1466 = vld [vmem:[#allocation6 + $0x4f0] sm:$0xff]
    %v1467 = vld [vmem:[#allocation6 + $0x4f8] sm:$0xff]
    %1468 = vmatprep.subr.mxu0 %v1309
    %1469 = vmatpush1.msra.mxu0 %v1308
    %1470 = vmatprep.subr.mxu0 %v1311
    %1471 = vmatpush1.msra.mxu0 %v1310
    %1472 = vmatprep.subr.mxu0 %v1313
    %1473 = vmatpush1.msra.mxu0 %v1312
    %1474 = vmatprep.subr.mxu0 %v1315
    %1475 = vmatpush1.msra.mxu0 %v1314
    %1476 = vmatprep.subr.mxu0 %v1317
    %1477 = vmatpush1.msra.mxu0 %v1316
    %1478 = vmatprep.subr.mxu0 %v1319
    %1479 = vmatpush1.msra.mxu0 %v1318
    %1480 = vmatprep.subr.mxu0 %v1321
    %1481 = vmatpush1.msra.mxu0 %v1320
    %1482 = vmatprep.subr.mxu0 %v1323
    %1483 = vmatpush1.msra.mxu0 %v1322
    %1484 = vmatprep.subr.mxu0 %v1325
    %1485 = vmatpush1.msra.mxu0 %v1324
    %1486 = vmatprep.subr.mxu0 %v1327
    %1487 = vmatpush1.msra.mxu0 %v1326
    %1488 = vmatprep.subr.mxu0 %v1329
    %1489 = vmatpush1.msra.mxu0 %v1328
    %1490 = vmatprep.subr.mxu0 %v1331
    %1491 = vmatpush1.msra.mxu0 %v1330
    %1492 = vmatprep.subr.mxu0 %v1333
    %1493 = vmatpush1.msra.mxu0 %v1332
    %1494 = vmatprep.subr.mxu0 %v1335
    %1495 = vmatpush1.msra.mxu0 %v1334
    %1496 = vmatprep.subr.mxu0 %v1337
    %1497 = vmatpush1.msra.mxu0 %v1336
    %1498 = vmatprep.subr.mxu0 %v1339
    %1499 = vmatpush1.msra.mxu0 %v1338
    %1500 = vmatprep.subr.mxu0 %v1341
    %1501 = vmatpush1.msra.mxu0 %v1340
    %1502 = vmatprep.subr.mxu0 %v1343
    %1503 = vmatpush1.msra.mxu0 %v1342
    %1504 = vmatprep.subr.mxu0 %v1345
    %1505 = vmatpush1.msra.mxu0 %v1344
    %1506 = vmatprep.subr.mxu0 %v1347
    %1507 = vmatpush1.msra.mxu0 %v1346
    %1508 = vmatprep.subr.mxu0 %v1349
    %1509 = vmatpush1.msra.mxu0 %v1348
    %1510 = vmatprep.subr.mxu0 %v1351
    %1511 = vmatpush1.msra.mxu0 %v1350
    %1512 = vmatprep.subr.mxu0 %v1353
    %1513 = vmatpush1.msra.mxu0 %v1352
    %1514 = vmatprep.subr.mxu0 %v1355
    %1515 = vmatpush1.msra.mxu0 %v1354
    %1516 = vmatprep.subr.mxu0 %v1357
    %1517 = vmatpush1.msra.mxu0 %v1356
    %1518 = vmatprep.subr.mxu0 %v1359
    %1519 = vmatpush1.msra.mxu0 %v1358
    %1520 = vmatprep.subr.mxu0 %v1361
    %1521 = vmatpush1.msra.mxu0 %v1360
    %1522 = vmatprep.subr.mxu0 %v1363
    %1523 = vmatpush1.msra.mxu0 %v1362
    %1524 = vmatprep.subr.mxu0 %v1365
    %1525 = vmatpush1.msra.mxu0 %v1364
    %1526 = vmatprep.subr.mxu0 %v1367
    %1527 = vmatpush1.msra.mxu0 %v1366
    %1528 = vmatprep.subr.mxu0 %v1369
    %1529 = vmatpush1.msra.mxu0 %v1368
    %1530 = vmatprep.subr.mxu0 %v1371
    %1531 = vmatpush1.msra.mxu0 %v1370
    %1532 = vmatprep.mubr.f32.mxu0 %v1304
    %1533 = vmatmul.mubr.f32.gmra.mrb[0].mxu0 %v1303
    %v1534 = vpop.f32.mrb[0].mxu0
    %v1535 = vadd.f32 0.0, %v1534
    %v1536 = vpop.f32.mrb[0].mxu0
    %v1537 = vadd.f32 0.0, %v1536
    %1538 = vdwg.mxu0
    %1539 = vmatprep.subr.mxu0 %v1373
    %1540 = vmatpush1.msra.mxu0 %v1372
    %1541 = vmatprep.subr.mxu0 %v1375
    %1542 = vmatpush1.msra.mxu0 %v1374
    %1543 = vmatprep.subr.mxu0 %v1377
    %1544 = vmatpush1.msra.mxu0 %v1376
    %1545 = vmatprep.subr.mxu0 %v1379
    %1546 = vmatpush1.msra.mxu0 %v1378
    %1547 = vmatprep.subr.mxu0 %v1381
    %1548 = vmatpush1.msra.mxu0 %v1380
    %1549 = vmatprep.subr.mxu0 %v1383
    %1550 = vmatpush1.msra.mxu0 %v1382
    %1551 = vmatprep.subr.mxu0 %v1385
    %1552 = vmatpush1.msra.mxu0 %v1384
    %1553 = vmatprep.subr.mxu0 %v1387
    %1554 = vmatpush1.msra.mxu0 %v1386
    %1555 = vmatprep.subr.mxu0 %v1389
    %1556 = vmatpush1.msra.mxu0 %v1388
    %1557 = vmatprep.subr.mxu0 %v1391
    %1558 = vmatpush1.msra.mxu0 %v1390
    %1559 = vmatprep.subr.mxu0 %v1393
    %1560 = vmatpush1.msra.mxu0 %v1392
    %1561 = vmatprep.subr.mxu0 %v1395
    %1562 = vmatpush1.msra.mxu0 %v1394
    %1563 = vmatprep.subr.mxu0 %v1397
    %1564 = vmatpush1.msra.mxu0 %v1396
    %1565 = vmatprep.subr.mxu0 %v1399
    %1566 = vmatpush1.msra.mxu0 %v1398
    %1567 = vmatprep.subr.mxu0 %v1401
    %1568 = vmatpush1.msra.mxu0 %v1400
    %1569 = vmatprep.subr.mxu0 %v1403
    %1570 = vmatpush1.msra.mxu0 %v1402
    %1571 = vmatprep.subr.mxu0 %v1405
    %1572 = vmatpush1.msra.mxu0 %v1404
    %1573 = vmatprep.subr.mxu0 %v1407
    %1574 = vmatpush1.msra.mxu0 %v1406
    %1575 = vmatprep.subr.mxu0 %v1409
    %1576 = vmatpush1.msra.mxu0 %v1408
    %1577 = vmatprep.subr.mxu0 %v1411
    %1578 = vmatpush1.msra.mxu0 %v1410
    %1579 = vmatprep.subr.mxu0 %v1413
    %1580 = vmatpush1.msra.mxu0 %v1412
    %1581 = vmatprep.subr.mxu0 %v1415
    %1582 = vmatpush1.msra.mxu0 %v1414
    %1583 = vmatprep.subr.mxu0 %v1417
    %1584 = vmatpush1.msra.mxu0 %v1416
    %1585 = vmatprep.subr.mxu0 %v1419
    %1586 = vmatpush1.msra.mxu0 %v1418
    %1587 = vmatprep.subr.mxu0 %v1421
    %1588 = vmatpush1.msra.mxu0 %v1420
    %1589 = vmatprep.subr.mxu0 %v1423
    %1590 = vmatpush1.msra.mxu0 %v1422
    %1591 = vmatprep.subr.mxu0 %v1425
    %1592 = vmatpush1.msra.mxu0 %v1424
    %1593 = vmatprep.subr.mxu0 %v1427
    %1594 = vmatpush1.msra.mxu0 %v1426
    %1595 = vmatprep.subr.mxu0 %v1429
    %1596 = vmatpush1.msra.mxu0 %v1428
    %1597 = vmatprep.subr.mxu0 %v1431
    %1598 = vmatpush1.msra.mxu0 %v1430
    %1599 = vmatprep.subr.mxu0 %v1433
    %1600 = vmatpush1.msra.mxu0 %v1432
    %1601 = vmatprep.subr.mxu0 %v1435
    %1602 = vmatpush1.msra.mxu0 %v1434
    %1603 = vmatprep.mubr.f32.mxu0 %v1306
    %1604 = vmatmul.mubr.f32.gmra.mrb[0].mxu0 %v1305
    %v1605 = vpop.f32.mrb[0].mxu0
    %v1606 = vadd.f32 %v1535, %v1605
    %v1607 = vpop.f32.mrb[0].mxu0
    %v1608 = vadd.f32 %v1537, %v1607
    %1609 = vdwg.mxu0
    %1610 = vmatprep.subr.mxu0 %v1437
    %1611 = vmatpush1.msra.mxu0 %v1436
    %1612 = vmatprep.subr.mxu0 %v1439
    %1613 = vmatpush1.msra.mxu0 %v1438
    %1614 = vmatprep.subr.mxu0 %v1441
    %1615 = vmatpush1.msra.mxu0 %v1440
    %1616 = vmatprep.subr.mxu0 %v1443
    %1617 = vmatpush1.msra.mxu0 %v1442
    %1618 = vmatprep.subr.mxu0 %v1445
    %1619 = vmatpush1.msra.mxu0 %v1444
    %1620 = vmatprep.subr.mxu0 %v1447
    %1621 = vmatpush1.msra.mxu0 %v1446
    %1622 = vmatprep.subr.mxu0 %v1449
    %1623 = vmatpush1.msra.mxu0 %v1448
    %1624 = vmatprep.subr.mxu0 %v1451
    %1625 = vmatpush1.msra.mxu0 %v1450
    %1626 = vmatprep.subr.mxu0 %v1453
    %1627 = vmatpush1.msra.mxu0 %v1452
    %1628 = vmatprep.subr.mxu0 %v1455
    %1629 = vmatpush1.msra.mxu0 %v1454
    %1630 = vmatprep.subr.mxu0 %v1457
    %1631 = vmatpush1.msra.mxu0 %v1456
    %1632 = vmatprep.subr.mxu0 %v1459
    %1633 = vmatpush1.msra.mxu0 %v1458
    %1634 = vmatprep.subr.mxu0 %v1461
    %1635 = vmatpush1.msra.mxu0 %v1460
    %1636 = vmatprep.subr.mxu0 %v1463
    %1637 = vmatpush1.msra.mxu0 %v1462
    %1638 = vmatprep.subr.mxu0 %v1465
    %1639 = vmatpush1.msra.mxu0 %v1464
    %1640 = vmatprep.subr.mxu0 %v1467
    %1641 = vmatpush1.msra.mxu0 %v1466
    %1642 = vmatprep.subr.mxu0 0.0
    %1643 = vmatpush1.msra.mxu0 0.0
    %1644 = vmatprep.subr.mxu0 0.0
    %1645 = vmatpush1.msra.mxu0 0.0
    %1646 = vmatprep.subr.mxu0 0.0
    %1647 = vmatpush1.msra.mxu0 0.0
    %1648 = vmatprep.subr.mxu0 0.0
    %1649 = vmatpush1.msra.mxu0 0.0
    %1650 = vmatprep.subr.mxu0 0.0
    %1651 = vmatpush1.msra.mxu0 0.0
    %1652 = vmatprep.subr.mxu0 0.0
    %1653 = vmatpush1.msra.mxu0 0.0
    %1654 = vmatprep.subr.mxu0 0.0
    %1655 = vmatpush1.msra.mxu0 0.0
    %1656 = vmatprep.subr.mxu0 0.0
    %1657 = vmatpush1.msra.mxu0 0.0
    %1658 = vmatprep.subr.mxu0 0.0
    %1659 = vmatpush1.msra.mxu0 0.0
    %1660 = vmatprep.subr.mxu0 0.0
    %1661 = vmatpush1.msra.mxu0 0.0
    %1662 = vmatprep.subr.mxu0 0.0
    %1663 = vmatpush1.msra.mxu0 0.0
    %1664 = vmatprep.subr.mxu0 0.0
    %1665 = vmatpush1.msra.mxu0 0.0
    %1666 = vmatprep.subr.mxu0 0.0
    %1667 = vmatpush1.msra.mxu0 0.0
    %1668 = vmatprep.subr.mxu0 0.0
    %1669 = vmatpush1.msra.mxu0 0.0
    %1670 = vmatprep.subr.mxu0 0.0
    %1671 = vmatpush1.msra.mxu0 0.0
    %1672 = vmatprep.subr.mxu0 0.0
    %1673 = vmatpush1.msra.mxu0 0.0
    %1674 = vmatprep.mubr.f32.mxu0 0.0
    %1675 = vmatmul.mubr.f32.gmra.mrb[0].mxu0 %v1307
    %v1676 = vpop.f32.mrb[0].mxu0
    %v1677 = vadd.f32 %v1606, %v1676
    %v1678 = vpop.f32.mrb[0].mxu0
    %v1679 = vadd.f32 %v1608, %v1678
    %1680 = vdwg.mxu0
    %1681 = vmatprep.subr.mxu0 %v1144
    %1682 = vmatpush1.msra.mxu0 %v1143
    %1683 = vmatprep.subr.mxu0 %v1146
    %1684 = vmatpush1.msra.mxu0 %v1145
    %1685 = vmatprep.subr.mxu0 %v1148
    %1686 = vmatpush1.msra.mxu0 %v1147
    %1687 = vmatprep.subr.mxu0 %v1150
    %1688 = vmatpush1.msra.mxu0 %v1149
    %1689 = vmatprep.subr.mxu0 %v1152
    %1690 = vmatpush1.msra.mxu0 %v1151
    %1691 = vmatprep.subr.mxu0 %v1154
    %1692 = vmatpush1.msra.mxu0 %v1153
    %1693 = vmatprep.subr.mxu0 %v1156
    %1694 = vmatpush1.msra.mxu0 %v1155
    %1695 = vmatprep.subr.mxu0 %v1158
    %1696 = vmatpush1.msra.mxu0 %v1157
    %1697 = vmatprep.subr.mxu0 %v1160
    %1698 = vmatpush1.msra.mxu0 %v1159
    %1699 = vmatprep.subr.mxu0 %v1162
    %1700 = vmatpush1.msra.mxu0 %v1161
    %1701 = vmatprep.subr.mxu0 %v1164
    %1702 = vmatpush1.msra.mxu0 %v1163
    %1703 = vmatprep.subr.mxu0 %v1166
    %1704 = vmatpush1.msra.mxu0 %v1165
    %1705 = vmatprep.subr.mxu0 %v1168
    %1706 = vmatpush1.msra.mxu0 %v1167
    %1707 = vmatprep.subr.mxu0 %v1170
    %1708 = vmatpush1.msra.mxu0 %v1169
    %1709 = vmatprep.subr.mxu0 %v1172
    %1710 = vmatpush1.msra.mxu0 %v1171
    %1711 = vmatprep.subr.mxu0 %v1174
    %1712 = vmatpush1.msra.mxu0 %v1173
    %1713 = vmatprep.subr.mxu0 %v1176
    %1714 = vmatpush1.msra.mxu0 %v1175
    %1715 = vmatprep.subr.mxu0 %v1178
    %1716 = vmatpush1.msra.mxu0 %v1177
    %1717 = vmatprep.subr.mxu0 %v1180
    %1718 = vmatpush1.msra.mxu0 %v1179
    %1719 = vmatprep.subr.mxu0 %v1182
    %1720 = vmatpush1.msra.mxu0 %v1181
    %1721 = vmatprep.subr.mxu0 %v1184
    %1722 = vmatpush1.msra.mxu0 %v1183
    %1723 = vmatprep.subr.mxu0 %v1186
    %1724 = vmatpush1.msra.mxu0 %v1185
    %1725 = vmatprep.subr.mxu0 %v1188
    %1726 = vmatpush1.msra.mxu0 %v1187
    %1727 = vmatprep.subr.mxu0 %v1190
    %1728 = vmatpush1.msra.mxu0 %v1189
    %1729 = vmatprep.subr.mxu0 %v1192
    %1730 = vmatpush1.msra.mxu0 %v1191
    %1731 = vmatprep.subr.mxu0 %v1194
    %1732 = vmatpush1.msra.mxu0 %v1193
    %1733 = vmatprep.subr.mxu0 %v1196
    %1734 = vmatpush1.msra.mxu0 %v1195
    %1735 = vmatprep.subr.mxu0 %v1198
    %1736 = vmatpush1.msra.mxu0 %v1197
    %1737 = vmatprep.subr.mxu0 %v1200
    %1738 = vmatpush1.msra.mxu0 %v1199
    %1739 = vmatprep.subr.mxu0 %v1202
    %1740 = vmatpush1.msra.mxu0 %v1201
    %1741 = vmatprep.subr.mxu0 %v1204
    %1742 = vmatpush1.msra.mxu0 %v1203
    %1743 = vmatprep.subr.mxu0 %v1206
    %1744 = vmatpush1.msra.mxu0 %v1205
    %1745 = vmatprep.mubr.f32.mxu0 %v1139
    %1746 = vmatmul.mubr.f32.gmra.mrb[0].mxu0 %v1138
    %v1747 = vpop.f32.mrb[0].mxu0
    %v1748 = vadd.f32 %v1677, %v1747
    %v1749 = vpop.f32.mrb[0].mxu0
    %v1750 = vadd.f32 %v1679, %v1749
    %1751 = vdwg.mxu0
    %1752 = vmatprep.subr.mxu0 %v1208
    %1753 = vmatpush1.msra.mxu0 %v1207
    %1754 = vmatprep.subr.mxu0 %v1210
    %1755 = vmatpush1.msra.mxu0 %v1209
    %1756 = vmatprep.subr.mxu0 %v1212
    %1757 = vmatpush1.msra.mxu0 %v1211
    %1758 = vmatprep.subr.mxu0 %v1214
    %1759 = vmatpush1.msra.mxu0 %v1213
    %1760 = vmatprep.subr.mxu0 %v1216
    %1761 = vmatpush1.msra.mxu0 %v1215
    %1762 = vmatprep.subr.mxu0 %v1218
    %1763 = vmatpush1.msra.mxu0 %v1217
    %1764 = vmatprep.subr.mxu0 %v1220
    %1765 = vmatpush1.msra.mxu0 %v1219
    %1766 = vmatprep.subr.mxu0 %v1222
    %1767 = vmatpush1.msra.mxu0 %v1221
    %1768 = vmatprep.subr.mxu0 %v1224
    %1769 = vmatpush1.msra.mxu0 %v1223
    %1770 = vmatprep.subr.mxu0 %v1226
    %1771 = vmatpush1.msra.mxu0 %v1225
    %1772 = vmatprep.subr.mxu0 %v1228
    %1773 = vmatpush1.msra.mxu0 %v1227
    %1774 = vmatprep.subr.mxu0 %v1230
    %1775 = vmatpush1.msra.mxu0 %v1229
    %1776 = vmatprep.subr.mxu0 %v1232
    %1777 = vmatpush1.msra.mxu0 %v1231
    %1778 = vmatprep.subr.mxu0 %v1234
    %1779 = vmatpush1.msra.mxu0 %v1233
    %1780 = vmatprep.subr.mxu0 %v1236
    %1781 = vmatpush1.msra.mxu0 %v1235
    %1782 = vmatprep.subr.mxu0 %v1238
    %1783 = vmatpush1.msra.mxu0 %v1237
    %1784 = vmatprep.subr.mxu0 %v1240
    %1785 = vmatpush1.msra.mxu0 %v1239
    %1786 = vmatprep.subr.mxu0 %v1242
    %1787 = vmatpush1.msra.mxu0 %v1241
    %1788 = vmatprep.subr.mxu0 %v1244
    %1789 = vmatpush1.msra.mxu0 %v1243
    %1790 = vmatprep.subr.mxu0 %v1246
    %1791 = vmatpush1.msra.mxu0 %v1245
    %1792 = vmatprep.subr.mxu0 %v1248
    %1793 = vmatpush1.msra.mxu0 %v1247
    %1794 = vmatprep.subr.mxu0 %v1250
    %1795 = vmatpush1.msra.mxu0 %v1249
    %1796 = vmatprep.subr.mxu0 %v1252
    %1797 = vmatpush1.msra.mxu0 %v1251
    %1798 = vmatprep.subr.mxu0 %v1254
    %1799 = vmatpush1.msra.mxu0 %v1253
    %1800 = vmatprep.subr.mxu0 %v1256
    %1801 = vmatpush1.msra.mxu0 %v1255
    %1802 = vmatprep.subr.mxu0 %v1258
    %1803 = vmatpush1.msra.mxu0 %v1257
    %1804 = vmatprep.subr.mxu0 %v1260
    %1805 = vmatpush1.msra.mxu0 %v1259
    %1806 = vmatprep.subr.mxu0 %v1262
    %1807 = vmatpush1.msra.mxu0 %v1261
    %1808 = vmatprep.subr.mxu0 %v1264
    %1809 = vmatpush1.msra.mxu0 %v1263
    %1810 = vmatprep.subr.mxu0 %v1266
    %1811 = vmatpush1.msra.mxu0 %v1265
    %1812 = vmatprep.subr.mxu0 %v1268
    %1813 = vmatpush1.msra.mxu0 %v1267
    %1814 = vmatprep.subr.mxu0 %v1270
    %1815 = vmatpush1.msra.mxu0 %v1269
    %1816 = vmatprep.mubr.f32.mxu0 %v1141
    %1817 = vmatmul.mubr.f32.gmra.mrb[0].mxu0 %v1140
    %v1818 = vpop.f32.mrb[0].mxu0
    %v1819 = vadd.f32 %v1748, %v1818
    %v1820 = vpop.f32.mrb[0].mxu0
    %v1821 = vadd.f32 %v1750, %v1820
    %1822 = vdwg.mxu0
    %1823 = vmatprep.subr.mxu0 %v1272
    %1824 = vmatpush1.msra.mxu0 %v1271
    %1825 = vmatprep.subr.mxu0 %v1274
    %1826 = vmatpush1.msra.mxu0 %v1273
    %1827 = vmatprep.subr.mxu0 %v1276
    %1828 = vmatpush1.msra.mxu0 %v1275
    %1829 = vmatprep.subr.mxu0 %v1278
    %1830 = vmatpush1.msra.mxu0 %v1277
    %1831 = vmatprep.subr.mxu0 %v1280
    %1832 = vmatpush1.msra.mxu0 %v1279
    %1833 = vmatprep.subr.mxu0 %v1282
    %1834 = vmatpush1.msra.mxu0 %v1281
    %1835 = vmatprep.subr.mxu0 %v1284
    %1836 = vmatpush1.msra.mxu0 %v1283
    %1837 = vmatprep.subr.mxu0 %v1286
    %1838 = vmatpush1.msra.mxu0 %v1285
    %1839 = vmatprep.subr.mxu0 %v1288
    %1840 = vmatpush1.msra.mxu0 %v1287
    %1841 = vmatprep.subr.mxu0 %v1290
    %1842 = vmatpush1.msra.mxu0 %v1289
    %1843 = vmatprep.subr.mxu0 %v1292
    %1844 = vmatpush1.msra.mxu0 %v1291
    %1845 = vmatprep.subr.mxu0 %v1294
    %1846 = vmatpush1.msra.mxu0 %v1293
    %1847 = vmatprep.subr.mxu0 %v1296
    %1848 = vmatpush1.msra.mxu0 %v1295
    %1849 = vmatprep.subr.mxu0 %v1298
    %1850 = vmatpush1.msra.mxu0 %v1297
    %1851 = vmatprep.subr.mxu0 %v1300
    %1852 = vmatpush1.msra.mxu0 %v1299
    %1853 = vmatprep.subr.mxu0 %v1302
    %1854 = vmatpush1.msra.mxu0 %v1301
    %1855 = vmatprep.subr.mxu0 0.0
    %1856 = vmatpush1.msra.mxu0 0.0
    %1857 = vmatprep.subr.mxu0 0.0
    %1858 = vmatpush1.msra.mxu0 0.0
    %1859 = vmatprep.subr.mxu0 0.0
    %1860 = vmatpush1.msra.mxu0 0.0
    %1861 = vmatprep.subr.mxu0 0.0
    %1862 = vmatpush1.msra.mxu0 0.0
    %1863 = vmatprep.subr.mxu0 0.0
    %1864 = vmatpush1.msra.mxu0 0.0
    %1865 = vmatprep.subr.mxu0 0.0
    %1866 = vmatpush1.msra.mxu0 0.0
    %1867 = vmatprep.subr.mxu0 0.0
    %1868 = vmatpush1.msra.mxu0 0.0
    %1869 = vmatprep.subr.mxu0 0.0
    %1870 = vmatpush1.msra.mxu0 0.0
    %1871 = vmatprep.subr.mxu0 0.0
    %1872 = vmatpush1.msra.mxu0 0.0
    %1873 = vmatprep.subr.mxu0 0.0
    %1874 = vmatpush1.msra.mxu0 0.0
    %1875 = vmatprep.subr.mxu0 0.0
    %1876 = vmatpush1.msra.mxu0 0.0
    %1877 = vmatprep.subr.mxu0 0.0
    %1878 = vmatpush1.msra.mxu0 0.0
    %1879 = vmatprep.subr.mxu0 0.0
    %1880 = vmatpush1.msra.mxu0 0.0
    %1881 = vmatprep.subr.mxu0 0.0
    %1882 = vmatpush1.msra.mxu0 0.0
    %1883 = vmatprep.subr.mxu0 0.0
    %1884 = vmatpush1.msra.mxu0 0.0
    %1885 = vmatprep.subr.mxu0 0.0
    %1886 = vmatpush1.msra.mxu0 0.0
    %1887 = vmatprep.mubr.f32.mxu0 0.0
    %1888 = vmatmul.mubr.f32.gmra.mrb[0].mxu0 %v1142
    %v1889 = vpop.f32.mrb[0].mxu0
    %v1890 = vadd.f32 %v1819, %v1889
    %v1891 = vpop.f32.mrb[0].mxu0
    %v1892 = vadd.f32 %v1821, %v1891
    %1893 = vdwg.mxu0
    %v1894 = vld [vmem:[#allocation7] sm:$0xff]
    %v1895 = vld [vmem:[#allocation7 + $0x8] sm:$0xff]
    %v1896 = vld [vmem:[#allocation7 + $0x10] sm:$0xff]
    %v1897 = vld [vmem:[#allocation7 + $0x18] sm:$0xff]
    %v1898 = vld [vmem:[#allocation7 + $0x20] sm:$0xff]
    %v1899 = vld [vmem:[#allocation7 + $0x28] sm:$0xff]
    %v1900 = vld [vmem:[#allocation7 + $0x30] sm:$0xff]
    %v1901 = vld [vmem:[#allocation7 + $0x38] sm:$0xff]
    %v1902 = vld [vmem:[#allocation7 + $0x40] sm:$0xff]
    %v1903 = vld [vmem:[#allocation7 + $0x48] sm:$0xff]
    %v1904 = vld [vmem:[#allocation7 + $0x50] sm:$0xff]
    %v1905 = vld [vmem:[#allocation7 + $0x58] sm:$0xff]
    %v1906 = vld [vmem:[#allocation7 + $0x60] sm:$0xff]
    %v1907 = vld [vmem:[#allocation7 + $0x68] sm:$0xff]
    %v1908 = vld [vmem:[#allocation7 + $0x70] sm:$0xff]
    %v1909 = vld [vmem:[#allocation7 + $0x78] sm:$0xff]
    %v1910 = vld [vmem:[#allocation7 + $0x80] sm:$0xff]
    %v1911 = vld [vmem:[#allocation7 + $0x88] sm:$0xff]
    %v1912 = vld [vmem:[#allocation7 + $0x90] sm:$0xff]
    %v1913 = vld [vmem:[#allocation7 + $0x98] sm:$0xff]
    %v1914 = vld [vmem:[#allocation7 + $0xa0] sm:$0xff]
    %v1915 = vld [vmem:[#allocation7 + $0xa8] sm:$0xff]
    %v1916 = vld [vmem:[#allocation7 + $0xb0] sm:$0xff]
    %v1917 = vld [vmem:[#allocation7 + $0xb8] sm:$0xff]
    %v1918 = vld [vmem:[#allocation7 + $0xc0] sm:$0xff]
    %v1919 = vld [vmem:[#allocation7 + $0xc8] sm:$0xff]
    %v1920 = vld [vmem:[#allocation7 + $0xd0] sm:$0xff]
    %v1921 = vld [vmem:[#allocation7 + $0xd8] sm:$0xff]
    %v1922 = vld [vmem:[#allocation7 + $0xe0] sm:$0xff]
    %v1923 = vld [vmem:[#allocation7 + $0xe8] sm:$0xff]
    %v1924 = vld [vmem:[#allocation7 + $0xf0] sm:$0xff]
    %v1925 = vld [vmem:[#allocation7 + $0xf8] sm:$0xff]
    %v1926 = vld [vmem:[#allocation7 + $0x100] sm:$0xff]
    %v1927 = vld [vmem:[#allocation7 + $0x108] sm:$0xff]
    %v1928 = vld [vmem:[#allocation7 + $0x110] sm:$0xff]
    %v1929 = vld [vmem:[#allocation7 + $0x118] sm:$0xff]
    %v1930 = vld [vmem:[#allocation7 + $0x120] sm:$0xff]
    %v1931 = vld [vmem:[#allocation7 + $0x128] sm:$0xff]
    %v1932 = vld [vmem:[#allocation7 + $0x130] sm:$0xff]
    %v1933 = vld [vmem:[#allocation7 + $0x138] sm:$0xff]
    %v1934 = vld [vmem:[#allocation7 + $0x140] sm:$0xff]
    %v1935 = vld [vmem:[#allocation7 + $0x148] sm:$0xff]
    %v1936 = vld [vmem:[#allocation7 + $0x150] sm:$0xff]
    %v1937 = vld [vmem:[#allocation7 + $0x158] sm:$0xff]
    %v1938 = vld [vmem:[#allocation7 + $0x160] sm:$0xff]
    %v1939 = vld [vmem:[#allocation7 + $0x168] sm:$0xff]
    %v1940 = vld [vmem:[#allocation7 + $0x170] sm:$0xff]
    %v1941 = vld [vmem:[#allocation7 + $0x178] sm:$0xff]
    %v1942 = vld [vmem:[#allocation7 + $0x180] sm:$0xff]
    %v1943 = vld [vmem:[#allocation7 + $0x188] sm:$0xff]
    %v1944 = vld [vmem:[#allocation7 + $0x190] sm:$0xff]
    %v1945 = vld [vmem:[#allocation7 + $0x198] sm:$0xff]
    %v1946 = vld [vmem:[#allocation7 + $0x1a0] sm:$0xff]
    %v1947 = vld [vmem:[#allocation7 + $0x1a8] sm:$0xff]
    %v1948 = vld [vmem:[#allocation7 + $0x1b0] sm:$0xff]
    %v1949 = vld [vmem:[#allocation7 + $0x1b8] sm:$0xff]
    %v1950 = vld [vmem:[#allocation7 + $0x1c0] sm:$0xff]
    %v1951 = vld [vmem:[#allocation7 + $0x1c8] sm:$0xff]
    %v1952 = vld [vmem:[#allocation7 + $0x1d0] sm:$0xff]
    %v1953 = vld [vmem:[#allocation7 + $0x1d8] sm:$0xff]
    %v1954 = vld [vmem:[#allocation7 + $0x1e0] sm:$0xff]
    %v1955 = vld [vmem:[#allocation7 + $0x1e8] sm:$0xff]
    %v1956 = vld [vmem:[#allocation7 + $0x1f0] sm:$0xff]
    %v1957 = vld [vmem:[#allocation7 + $0x1f8] sm:$0xff]
    %1958 = vmatprep.subr.mxu0 %v1895
    %1959 = vmatpush1.msra.mxu0 %v1894
    %1960 = vmatprep.subr.mxu0 %v1897
    %1961 = vmatpush1.msra.mxu0 %v1896
    %1962 = vmatprep.subr.mxu0 %v1899
    %1963 = vmatpush1.msra.mxu0 %v1898
    %1964 = vmatprep.subr.mxu0 %v1901
    %1965 = vmatpush1.msra.mxu0 %v1900
    %1966 = vmatprep.subr.mxu0 %v1903
    %1967 = vmatpush1.msra.mxu0 %v1902
    %1968 = vmatprep.subr.mxu0 %v1905
    %1969 = vmatpush1.msra.mxu0 %v1904
    %1970 = vmatprep.subr.mxu0 %v1907
    %1971 = vmatpush1.msra.mxu0 %v1906
    %1972 = vmatprep.subr.mxu0 %v1909
    %1973 = vmatpush1.msra.mxu0 %v1908
    %1974 = vmatprep.subr.mxu0 %v1911
    %1975 = vmatpush1.msra.mxu0 %v1910
    %1976 = vmatprep.subr.mxu0 %v1913
    %1977 = vmatpush1.msra.mxu0 %v1912
    %1978 = vmatprep.subr.mxu0 %v1915
    %1979 = vmatpush1.msra.mxu0 %v1914
    %1980 = vmatprep.subr.mxu0 %v1917
    %1981 = vmatpush1.msra.mxu0 %v1916
    %1982 = vmatprep.subr.mxu0 %v1919
    %1983 = vmatpush1.msra.mxu0 %v1918
    %1984 = vmatprep.subr.mxu0 %v1921
    %1985 = vmatpush1.msra.mxu0 %v1920
    %1986 = vmatprep.subr.mxu0 %v1923
    %1987 = vmatpush1.msra.mxu0 %v1922
    %1988 = vmatprep.subr.mxu0 %v1925
    %1989 = vmatpush1.msra.mxu0 %v1924
    %1990 = vmatprep.subr.mxu0 %v1927
    %1991 = vmatpush1.msra.mxu0 %v1926
    %1992 = vmatprep.subr.mxu0 %v1929
    %1993 = vmatpush1.msra.mxu0 %v1928
    %1994 = vmatprep.subr.mxu0 %v1931
    %1995 = vmatpush1.msra.mxu0 %v1930
    %1996 = vmatprep.subr.mxu0 %v1933
    %1997 = vmatpush1.msra.mxu0 %v1932
    %1998 = vmatprep.subr.mxu0 %v1935
    %1999 = vmatpush1.msra.mxu0 %v1934
    %2000 = vmatprep.subr.mxu0 %v1937
    %2001 = vmatpush1.msra.mxu0 %v1936
    %2002 = vmatprep.subr.mxu0 %v1939
    %2003 = vmatpush1.msra.mxu0 %v1938
    %2004 = vmatprep.subr.mxu0 %v1941
    %2005 = vmatpush1.msra.mxu0 %v1940
    %2006 = vmatprep.subr.mxu0 %v1943
    %2007 = vmatpush1.msra.mxu0 %v1942
    %2008 = vmatprep.subr.mxu0 %v1945
    %2009 = vmatpush1.msra.mxu0 %v1944
    %2010 = vmatprep.subr.mxu0 %v1947
    %2011 = vmatpush1.msra.mxu0 %v1946
    %2012 = vmatprep.subr.mxu0 %v1949
    %2013 = vmatpush1.msra.mxu0 %v1948
    %2014 = vmatprep.subr.mxu0 %v1951
    %2015 = vmatpush1.msra.mxu0 %v1950
    %2016 = vmatprep.subr.mxu0 %v1953
    %2017 = vmatpush1.msra.mxu0 %v1952
    %2018 = vmatprep.subr.mxu0 %v1955
    %2019 = vmatpush1.msra.mxu0 %v1954
    %2020 = vmatprep.subr.mxu0 %v1957
    %2021 = vmatpush1.msra.mxu0 %v1956
    %2022 = vmatprep.mubr.f32.mxu0 %v90
    %2023 = vmatmul.mubr.f32.gmra.mrb[0].mxu0 %v89
    %v2024 = vpop.f32.mrb[0].mxu0
    %v2025 = vadd.f32 0.0, %v2024
    %v2026 = vpop.f32.mrb[0].mxu0
    %v2027 = vadd.f32 0.0, %v2026
    %2028 = vdwg.mxu0
    %v2029 = vadd.f32 %v1890, %v2025
    %v2030 = vadd.f32 %v1892, %v2027
    %v2031 = vld [vmem:[#allocation9] sm:$0x3]
    %v2033 = vlaneseq
    %v2034 = vshrl.u32 %v2033, 7
    %v2035 = vsub.s32 0, %v2034
    %v2036 = vrot.slane %v2031, %v2035
    %v2037 = vlaneseq
    %v2038 = vshrl.u32 %v2037, 7
    %v2039 = vsub.s32 1, %v2038
    %v2040 = vrot.slane %v2031, %v2039
    %v2043 = vadd.f32 %v2029, %v2036
    %v2044 = vadd.f32 %v2030, %v2040
    %2045 = vst [vmem:[%s6] sm:$0xff] %v2043
    %2046 = vst [vmem:[%s6 + $0x8] sm:$0xff] %v2044
    // Predicated region
    $region46: #{qg_forward.1} parent=1 // pred_check
      _
    $region47: #{qg_forward.1} parent=1 // pred_check_branch
      %2048 = sbr.rel (0) target = $region49
    $region48: #{qg_forward.1} parent=1 // pred_region
      _
    $region49: #{qg_forward.1} parent=1 // pred_fallthru
      _
    // Predicated region
    $region50: #{qg_forward.1} parent=1 // pred_check
      _
    $region51: #{qg_forward.1} parent=1 // pred_check_branch
      %2050 = sbr.rel (0) target = $region53
    $region52: #{qg_forward.1} parent=1 // pred_region
      _
    $region53: #{qg_forward.1} parent=1 // pred_fallthru
      _
    %2051 = vsyncpa [#allocation3], 1
    %2052 = vsyncpa [#allocation5], 1
    %2053 = vsyncpa [#allocation8], 1

</llo_original>
